<compile_context>
chip_gen: v7x
topology: tpu7x:2x2x1
jax: 0.10.0
libtpu: 0.0.40
codegen_flags: <defaults>
</compile_context>

<pallas_src>
import functools
import math

import jax
import jax.numpy as jnp
from jax import lax
from jax.experimental import pallas as pl
from jax.experimental.pallas import tpu as pltpu


def _round_up(x, m):
    return ((x + m - 1) // m) * m


def _dwconv3x3_lanes(y, w9, left_ok, right_ok, width):
    """3x3 depthwise conv on a channel-first, lane-flattened row block.

    y:        (K, npad) f32 -- rows [r*tr-1, r*tr+tr+1) of K feature maps, flattened
              row-major onto the lane axis and zero padded to a 128-lane multiple.
    w9:       (K, 9) f32 taps in (ky, kx) raster order.
    left_ok:  (1, npad) f32, 0 where the pixel sits in image column 0.
    right_ok: (1, npad) f32, 0 where the pixel sits in image column W-1.
    Returns (K, npad) f32; only the middle tr*W positions are valid (callers mask
    or slice them).  Vertical taps are lane rolls by +-W, horizontal taps are lane
    rolls by +-1 with an edge mask; wrapped lanes of the circular rolls only land
    on masked / discarded positions.  Single accumulation chain, no concatenated
    shifted copies.
    """
    n = y.shape[1]

    def wt(i):
        return w9[:, i:i + 1]                                  # (K, 1)

    above = pltpu.roll(y, shift=width % n, axis=1)             # above[p] = y[p - W]
    below = pltpu.roll(y, shift=(n - width) % n, axis=1)       # below[p] = y[p + W]
    cs_l = above * wt(0) + y * wt(3) + below * wt(6)           # column dx = -1 taps
    cs_c = above * wt(1) + y * wt(4) + below * wt(7)           # column dx =  0 taps
    cs_r = above * wt(2) + y * wt(5) + below * wt(8)           # column dx = +1 taps
    out = cs_c
    out = out + pltpu.roll(cs_l, shift=1, axis=1) * left_ok        # uses in[.., j-1]
    out = out + pltpu.roll(cs_r, shift=n - 1, axis=1) * right_ok   # uses in[.., j+1]
    # TODO(synk): on v6e/v7x the tap arithmetic could run in bf16 (bf16 VALU).
    return out


def _assemble_ext(x_ref, halo_ref, width, npad):
    """[top halo row | block rows | bottom halo row | zero pad] along the lane axis."""
    C = x_ref.shape[0]
    pieces = [halo_ref[:, :width], x_ref[...], halo_ref[:, width:]]
    pad = npad - (x_ref.shape[1] + 2 * width)
    if pad:
        pieces.append(jnp.zeros((C, pad), x_ref.dtype))
    return jnp.concatenate(pieces, axis=1)                      # (C, npad)


def _mdta_stats_kernel(x_ref, halo_ref, wqk_ref, wdw_ref, wproj_ref, temp_ref,
                       masks_ref, eye_ref, bias_ref, m_ref, kq_acc, ssq_acc,
                       *, width, npad, compute_dtype):
    """Pass 1: accumulate K^T Q and per-channel squared norms over the row blocks;
    at the last row block emit the fused (block-diagonal attention o project_out)
    matrix M for this image."""
    C = x_ref.shape[0]
    r = pl.program_id(1)

    @pl.when(r == 0)
    def _():
        kq_acc[...] = jnp.zeros_like(kq_acc)
        ssq_acc[...] = jnp.zeros_like(ssq_acc)

    x_ext = _assemble_ext(x_ref, halo_ref, width, npad)             # (C, npad) cdt
    qk = jnp.dot(wqk_ref[...], x_ext,
                 preferred_element_type=jnp.float32)                # (2C, npad) f32

    left_ok = masks_ref[0:1, :]
    right_ok = masks_ref[1:2, :]
    valid = masks_ref[2:3, :]                                       # zero on halo/pad
    qk = _dwconv3x3_lanes(qk, wdw_ref[...], left_ok, right_ok, width) * valid

    # Folded L2 normalization: per-channel squared norms (VPU mult + lane reduce).
    ssq_acc[...] += jnp.sum(qk * qk, axis=1, keepdims=True)         # (2C, 1)

    # Only the K^T Q block of the old (2C,2C) gram is needed; contraction on the
    # last (lane) dim of both operands -> no XLU operand transpose.
    qd = qk[:C].astype(compute_dtype)
    kd = qk[C:].astype(compute_dtype)
    kq_acc[...] += lax.dot_general(kd, qd, (((1,), (1,)), ((), ())),
                                   preferred_element_type=jnp.float32)

    @pl.when(r == pl.num_programs(1) - 1)
    def _():
        inv = 1.0 / jnp.maximum(jnp.sqrt(ssq_acc[...]), 1e-12)      # (2C, 1)
        inv_q = inv[:C]
        inv_k = inv[C:]
        # NOTE: get_qkv() returns (k, q, v) which forward() unpacks as (q, k, v),
        # so the attention logits are k_norm @ q_norm^T -- reproduced exactly.
        logits = kq_acc[...] * (inv_k * temp_ref[...])              # row scale (C,1)
        dq = eye_ref[...] * inv_q                                   # diag(inv_q)
        logits = jnp.dot(logits, dq,
                         preferred_element_type=jnp.float32) + bias_ref[...]
        logits = logits - jnp.max(logits, axis=-1, keepdims=True)
        p = jnp.exp(logits)
        attn = p / jnp.sum(p, axis=-1, keepdims=True)               # block-diag / heads
        # Fused projection: M = Wproj @ blockdiag(attn); pass 2 applies out = M @ V.
        m_ref[...] = jnp.dot(wproj_ref[...], attn,
                             preferred_element_type=jnp.float32)


def _mdta_apply_kernel(x_ref, halo_ref, wv_ref, wdw_ref, masks_ref, m_ref, o_ref,
                       *, width, npad, compute_dtype):
    """Pass 2: recompute the V third per row block and emit M @ V (lane-dense)."""
    tr_w = x_ref.shape[1]
    x_ext = _assemble_ext(x_ref, halo_ref, width, npad)             # (C, npad) cdt
    v = jnp.dot(wv_ref[...], x_ext,
                preferred_element_type=jnp.float32)                 # (C, npad) f32
    v = _dwconv3x3_lanes(v, wdw_ref[...], masks_ref[0:1, :], masks_ref[1:2, :],
                         width)
    v_mid = v[:, width:width + tr_w].astype(compute_dtype)          # (C, tr*W)
    out = jnp.dot(m_ref[...].astype(compute_dtype), v_mid,
                  preferred_element_type=jnp.float32)               # (C, tr*W)
    o_ref[...] = out.astype(o_ref.dtype)


def _pick_block_rows(h, w, c, vmem_budget_bytes, max_rows=64):
    """Largest row-block height tr with tr | H, (tr*W) % 128 == 0 and a dwconv
    working set (~8 live (2C, npad) f32 buffers) inside the VMEM budget."""
    step = 128 // math.gcd(w, 128)
    best = None
    limit = min(h, max(step, max_rows))
    for tr in range(step, limit + 1, step):
        if h % tr:
            continue
        npad = _round_up((tr + 2) * w, 128)
        if 8 * (2 * c) * npad * 4 <= vmem_budget_bytes:
            best = tr
    return best if best is not None else h


def mdta_forward(x_nchw, w_qkv, w_dw, w_proj, temperature, num_heads,
                 *, block_rows=None, mxu_dtype=jnp.bfloat16):
    """x_nchw: (B, C, H, W); w_qkv: (3C, C); w_dw: (3C, 3, 3); w_proj: (C, C);
    temperature: (heads, 1, 1).  Returns (B, C, H, W), matching the PyTorch module.

    mxu_dtype is the MXU operand dtype AND the dtype x is staged in HBM with
    (bfloat16 default on every generation).  Accumulation, depthwise taps and the
    softmax/normalization math stay float32; pass mxu_dtype=jnp.float32 if the
    bf16-rounded activation statistics are not acceptable.
    """
    B, C, H, W = x_nchw.shape
    assert C % num_heads == 0
    d = C // num_heads
    cdt = jnp.dtype(mxu_dtype) if mxu_dtype is not None else jnp.dtype(x_nchw.dtype)

    # Generation-aware VMEM limit (v7x: 64 MiB physical vs 128 MiB on v5e/v6e).
    try:
        vmem_cap = int(pltpu.get_tpu_info().vmem_capacity_bytes)
    except Exception:  # conservative fallback if the query is unavailable
        vmem_cap = 64 * 1024 * 1024
    vmem_limit = max(16 * 1024 * 1024,
                     min(64 * 1024 * 1024, (vmem_cap * 9) // 16))

    tr = block_rows if block_rows is not None else _pick_block_rows(
        H, W, C, vmem_limit // 3)
    assert H % tr == 0
    assert (tr * W) % 128 == 0 or tr == H, (
        "row block must give a lane-aligned pixel block (tr*W % 128 == 0)")
    n_rb = H // tr
    npad = _round_up((tr + 2) * W, 128)

    # ---- host glue: layout plumbing only, no full-tensor transposes ----
    x_flat = x_nchw.reshape(B, C, H * W).astype(cdt)          # NCHW, pixels on lanes
    # Per-block halo rows: block r needs image rows r*tr-1 (top) and (r+1)*tr
    # (bottom), zeros at the image boundary.
    x4 = x_nchw.astype(cdt)
    zrow = jnp.zeros((B, C, 1, W), cdt)
    top = jnp.concatenate([zrow, x4[:, :, tr - 1:H - 1:tr, :]], axis=2)  # (B,C,n_rb,W)
    bot = jnp.concatenate([x4[:, :, tr:H:tr, :], zrow], axis=2)          # (B,C,n_rb,W)
    halos = jnp.transpose(jnp.stack([top, bot], axis=3),
                          (0, 2, 1, 3, 4)).reshape(B, n_rb, C, 2 * W)

    wqk = w_qkv[:2 * C].astype(cdt)                           # (2C, C)  q,k thirds
    wv = w_qkv[2 * C:].astype(cdt)                            # (C, C)   v third
    wdw_qk = w_dw[:2 * C].reshape(2 * C, 9).astype(jnp.float32)
    wdw_v = w_dw[2 * C:].reshape(C, 9).astype(jnp.float32)
    wproj = w_proj.astype(jnp.float32)                        # (C, C)
    temp_col = jnp.repeat(
        temperature.reshape(num_heads).astype(jnp.float32), d).reshape(C, 1)

    # Edge / validity masks for the lane-flattened (tr+2, W) row block (host-built
    # so the kernel has no integer div/mod vector ops).
    pos = jnp.arange(npad)
    in_img = pos < (tr + 2) * W
    colw = pos % W
    rowi = pos // W
    masks = jnp.stack([(colw != 0) & in_img,
                       (colw != W - 1) & in_img,
                       (rowi >= 1) & (rowi <= tr) & in_img]).astype(jnp.float32)

    eye = jnp.eye(C, dtype=jnp.float32)
    head = jnp.repeat(jnp.arange(num_heads), d)
    head_bias = jnp.where(head[:, None] == head[None, :], 0.0,
                          -1e30).astype(jnp.float32)          # (C, C) additive mask

    # TODO(synk): on v7x with B == 1, add a second "parallel" grid axis splitting the
    # row blocks across the two TensorCores (per-core partial kq/ssq accumulators).
    cparams = pltpu.CompilerParams(
        dimension_semantics=("parallel", "arbitrary"),
        vmem_limit_bytes=vmem_limit)

    # Pass 1: streamed K^T Q / ssq accumulation + fused attention/projection matrix.
    stats = functools.partial(_mdta_stats_kernel, width=W, npad=npad,
                              compute_dtype=cdt)
    m_mat = pl.pallas_call(
        stats,
        out_shape=jax.ShapeDtypeStruct((B, C, C), jnp.float32),
        grid_spec=pltpu.PrefetchScalarGridSpec(
            num_scalar_prefetch=0,
            grid=(B, n_rb),
            in_specs=[
                pl.BlockSpec((None, C, tr * W), lambda b, r: (b, 0, r)),         # x row block
                pl.BlockSpec((None, None, C, 2 * W), lambda b, r: (b, r, 0, 0)),  # halo rows
                pl.BlockSpec((2 * C, C), lambda b, r: (0, 0)),                   # Wqk
                pl.BlockSpec((2 * C, 9), lambda b, r: (0, 0)),                   # dw taps (q,k)
                pl.BlockSpec((C, C), lambda b, r: (0, 0)),                       # Wproj
                pl.BlockSpec((C, 1), lambda b, r: (0, 0)),                       # temperature
                pl.BlockSpec((3, npad), lambda b, r: (0, 0)),                    # edge masks
                pl.BlockSpec((C, C), lambda b, r: (0, 0)),                       # identity
                pl.BlockSpec((C, C), lambda b, r: (0, 0)),                       # head bias
            ],
            out_specs=pl.BlockSpec((None, C, C), lambda b, r: (b, 0, 0)),
            scratch_shapes=[pltpu.VMEM((C, C), jnp.float32),        # K^T Q accumulator
                            pltpu.VMEM((2 * C, 1), jnp.float32)],   # per-channel ssq
        ),
        compiler_params=cparams,
    )(x_flat, halos, wqk, wdw_qk, wproj, temp_col, masks, eye, head_bias)

    # Pass 2: recompute V per row block, apply M, store lane-dense NCHW blocks.
    apply_fn = functools.partial(_mdta_apply_kernel, width=W, npad=npad,
                                 compute_dtype=cdt)
    out_flat = pl.pallas_call(
        apply_fn,
        out_shape=jax.ShapeDtypeStruct((B, C, H * W), x_nchw.dtype),
        grid_spec=pltpu.PrefetchScalarGridSpec(
            num_scalar_prefetch=0,
            grid=(B, n_rb),
            in_specs=[
                pl.BlockSpec((None, C, tr * W), lambda b, r: (b, 0, r)),         # x row block
                pl.BlockSpec((None, None, C, 2 * W), lambda b, r: (b, r, 0, 0)),  # halo rows
                pl.BlockSpec((C, C), lambda b, r: (0, 0)),                       # Wv
                pl.BlockSpec((C, 9), lambda b, r: (0, 0)),                       # dw taps (v)
                pl.BlockSpec((3, npad), lambda b, r: (0, 0)),                    # edge masks
                pl.BlockSpec((None, C, C), lambda b, r: (b, 0, 0)),              # fused M
            ],
            out_specs=pl.BlockSpec((None, C, tr * W), lambda b, r: (b, 0, r)),
        ),
        compiler_params=cparams,
    )(x_flat, halos, wv, wdw_v, masks, m_mat)

    return out_flat.reshape(B, C, H, W)                       # NCHW directly


def mdta_reference(x, w_qkv, w_dw, w_proj, temperature, num_heads):
    """Pure-JAX NCHW reference mirroring the PyTorch forward exactly."""
    B, C, H, W = x.shape
    qkv = lax.conv_general_dilated(
        x, w_qkv.reshape(3 * C, C, 1, 1), (1, 1), 'VALID',
        dimension_numbers=('NCHW', 'OIHW', 'NCHW'))
    qkv = lax.conv_general_dilated(
        qkv, w_dw.reshape(3 * C, 1, 3, 3), (1, 1), ((1, 1), (1, 1)),
        dimension_numbers=('NCHW', 'OIHW', 'NCHW'),
        feature_group_count=3 * C)
    q, k, v = jnp.split(qkv, 3, axis=1)
    d = C // num_heads
    q = q.reshape(B, num_heads, d, H * W)
    k = k.reshape(B, num_heads, d, H * W)
    v = v.reshape(B, num_heads, d, H * W)

    def l2n(t):
        n = jnp.sqrt(jnp.sum(t * t, axis=-1, keepdims=True))
        return t / jnp.maximum(n, 1e-12)

    q_n, k_n = l2n(q), l2n(k)
    # forward's (q, k, v) = get_qkv() returning (k, q, v)  =>  logits = k_n @ q_n^T
    logits = jnp.einsum('bhdn,bhen->bhde', k_n, q_n) * temperature[None]
    attn = jax.nn.softmax(logits, axis=-1)
    out = jnp.einsum('bhde,bhen->bhdn', attn, v).reshape(B, C, H, W)
    out = lax.conv_general_dilated(
        out, w_proj.reshape(C, C, 1, 1), (1, 1), 'VALID',
        dimension_numbers=('NCHW', 'OIHW', 'NCHW'))
    return out


if __name__ == "__main__":
    B, C, H, W = 2, 8, 16, 16
    num_heads = 2

    key = jax.random.PRNGKey(0)
    k1, k2, k3, k4, k5 = jax.random.split(key, 5)
    x = jax.random.normal(k1, (B, C, H, W), jnp.float32)
    w_qkv = jax.random.normal(k2, (3 * C, C), jnp.float32) * 0.2      # Conv2d(C, 3C, 1)
    w_dw = jax.random.normal(k3, (3 * C, 3, 3), jnp.float32) * 0.2    # depthwise 3x3
    w_proj = jax.random.normal(k4, (C, C), jnp.float32) * 0.2         # Conv2d(C, C, 1)
    # PyTorch __init__ sets temperature = ones(heads,1,1); use a non-trivial value
    # to exercise the per-head scaling.
    temperature = 1.0 + 0.1 * jax.random.normal(k5, (num_heads, 1, 1), jnp.float32)

    ref = jax.block_until_ready(
        mdta_reference(x, w_qkv, w_dw, w_proj, temperature, num_heads))

    # f32 MXU-operand path; block_rows=8 -> 2 row blocks per image, exercising the
    # streamed K^T Q / ssq accumulation and both halo boundaries.
    out_f32 = jax.block_until_ready(
        mdta_forward(x, w_qkv, w_dw, w_proj, temperature, num_heads,
                     block_rows=8, mxu_dtype=jnp.float32))
    err = float(jnp.max(jnp.abs(out_f32 - ref)))
    assert err < 1e-3, f"f32 path: max abs error vs reference: {err}"

    # Default path: bf16 MXU operands (recommended on all generations), auto tiling.
    out_bf16 = jax.block_until_ready(
        mdta_forward(x, w_qkv, w_dw, w_proj, temperature, num_heads))
    err_bf16 = float(jnp.max(jnp.abs(out_bf16 - ref)))
    assert err_bf16 < 1e-1, f"bf16 path: max abs error vs reference: {err_bf16}"

    print("KERNEL_OK")
</pallas_src>

<mosaic_0001>
module attributes {stable_mosaic.version = 11 : i64} {
  func.func @_mdta_stats_kernel(%arg0: i32, %arg1: i32, %arg2: memref<1x8x128xf32, #tpu.memory_space<vmem>>, %arg3: memref<1x1x8x32xf32, #tpu.memory_space<vmem>>, %arg4: memref<16x8xf32, #tpu.memory_space<vmem>>, %arg5: memref<16x9xf32, #tpu.memory_space<vmem>>, %arg6: memref<8x8xf32, #tpu.memory_space<vmem>>, %arg7: memref<8x1xf32, #tpu.memory_space<vmem>>, %arg8: memref<3x256xf32, #tpu.memory_space<vmem>>, %arg9: memref<8x8xf32, #tpu.memory_space<vmem>>, %arg10: memref<8x8xf32, #tpu.memory_space<vmem>>, %arg11: memref<1x8x8xf32, #tpu.memory_space<vmem>>, %arg12: memref<8x8xf32, #tpu.memory_space<vmem>>, %arg13: memref<16x1xf32, #tpu.memory_space<vmem>>) attributes {dimension_semantics = [#tpu.dimension_semantics<parallel>, #tpu.dimension_semantics<arbitrary>], iteration_bounds = array<i64: 2, 2>, scalar_prefetch = 0 : i64, scratch_operands = 2 : i64, tpu.core_type = #tpu.core_type<tc>, window_params = [{transform_indices = @transform_0, window_bounds = array<i64: 1, 8, 128>}, {transform_indices = @transform_1, window_bounds = array<i64: 1, 1, 8, 32>}, {pipeline_mode = #tpu.pipeline_mode<synchronous>, transform_indices = @transform_2, window_bounds = array<i64: 16, 8>}, {pipeline_mode = #tpu.pipeline_mode<synchronous>, transform_indices = @transform_3, window_bounds = array<i64: 16, 9>}, {pipeline_mode = #tpu.pipeline_mode<synchronous>, transform_indices = @transform_4, window_bounds = array<i64: 8, 8>}, {pipeline_mode = #tpu.pipeline_mode<synchronous>, transform_indices = @transform_5, window_bounds = array<i64: 8, 1>}, {pipeline_mode = #tpu.pipeline_mode<synchronous>, transform_indices = @transform_6, window_bounds = array<i64: 3, 256>}, {pipeline_mode = #tpu.pipeline_mode<synchronous>, transform_indices = @transform_7, window_bounds = array<i64: 8, 8>}, {pipeline_mode = #tpu.pipeline_mode<synchronous>, transform_indices = @transform_8, window_bounds = array<i64: 8, 8>}, {transform_indices = @transform_9, window_bounds = array<i64: 1, 8, 8>}]} {
    %c0_i32 = arith.constant 0 : i32
    %0 = arith.cmpi eq, %arg1, %c0_i32 : i32
    %1 = arith.extui %0 : i1 to i32
    %c0_i32_0 = arith.constant 0 : i32
    %2 = arith.cmpi ne, %1, %c0_i32_0 : i32
    scf.if %2 {
      %cst_31 = arith.constant 0.000000e+00 : f32
      %77 = vector.broadcast %cst_31 : f32 to vector<8x8xf32>
      %c0_32 = arith.constant 0 : index
      %c0_33 = arith.constant 0 : index
      %78 = vector.load %arg12[%c0_32, %c0_33] : memref<8x8xf32, #tpu.memory_space<vmem>>, vector<8x8xf32>
      tpu.vector_store %arg12[%c0_32, %c0_33], %77 {strides = array<i32>} : memref<8x8xf32, #tpu.memory_space<vmem>>, vector<8x8xf32>,
      %cst_34 = arith.constant 0.000000e+00 : f32
      %79 = vector.broadcast %cst_34 : f32 to vector<16x1xf32>
      %c0_35 = arith.constant 0 : index
      %c0_36 = arith.constant 0 : index
      %80 = vector.load %arg13[%c0_35, %c0_36] : memref<16x1xf32, #tpu.memory_space<vmem>>, vector<16x1xf32>
      tpu.vector_store %arg13[%c0_35, %c0_36], %79 {strides = array<i32>} : memref<16x1xf32, #tpu.memory_space<vmem>>, vector<16x1xf32>,
    } else {
    }
    %c0 = arith.constant 0 : index
    %c0_1 = arith.constant 0 : index
    %c0_2 = arith.constant 0 : index
    %c0_3 = arith.constant 0 : index
    %3 = vector.load %arg3[%c0, %c0_1, %c0_2, %c0_3] : memref<1x1x8x32xf32, #tpu.memory_space<vmem>>, vector<1x1x8x16xf32>
    %4 = vector.shape_cast %3 : vector<1x1x8x16xf32> to vector<8x16xf32>
    %c0_4 = arith.constant 0 : index
    %c0_5 = arith.constant 0 : index
    %c0_6 = arith.constant 0 : index
    %5 = vector.load %arg2[%c0_4, %c0_5, %c0_6] : memref<1x8x128xf32, #tpu.memory_space<vmem>>, vector<1x8x128xf32>
    %6 = vector.shape_cast %5 : vector<1x8x128xf32> to vector<8x128xf32>
    %c0_7 = arith.constant 0 : index
    %c0_8 = arith.constant 0 : index
    %c0_9 = arith.constant 0 : index
    %c16 = arith.constant 16 : index
    %7 = vector.load %arg3[%c0_7, %c0_8, %c0_9, %c16] : memref<1x1x8x32xf32, #tpu.memory_space<vmem>>, vector<1x1x8x16xf32>
    %8 = vector.shape_cast %7 : vector<1x1x8x16xf32> to vector<8x16xf32>
    %cst = arith.constant 0.000000e+00 : f32
    %9 = vector.broadcast %cst : f32 to vector<8x96xf32>
    %10 = tpu.concatenate %4, %6, %8, %9 in 1 : vector<8x16xf32>, vector<8x128xf32>, vector<8x16xf32>, vector<8x96xf32> -> vector<8x256xf32>
    %c0_10 = arith.constant 0 : index
    %c0_11 = arith.constant 0 : index
    %11 = vector.load %arg4[%c0_10, %c0_11] : memref<16x8xf32, #tpu.memory_space<vmem>>, vector<16x8xf32>
    %cst_12 = arith.constant dense<0.000000e+00> : vector<16x256xf32>
    %12 = tpu.matmul %11, %10, %cst_12 {dimension_numbers = #tpu.dot_dimension_numbers<[1], [0], [0], [1], [0, 0, 1, 1], [], []>} : vector<16x8xf32>, vector<8x256xf32>, vector<16x256xf32> -> vector<16x256xf32>
    %c0_13 = arith.constant 0 : index
    %c0_14 = arith.constant 0 : index
    %13 = vector.load %arg8[%c0_13, %c0_14] : memref<3x256xf32, #tpu.memory_space<vmem>>, vector<1x256xf32>
    %c1 = arith.constant 1 : index
    %c0_15 = arith.constant 0 : index
    %14 = vector.load %arg8[%c1, %c0_15] : memref<3x256xf32, #tpu.memory_space<vmem>>, vector<1x256xf32>
    %c2 = arith.constant 2 : index
    %c0_16 = arith.constant 0 : index
    %15 = vector.load %arg8[%c2, %c0_16] : memref<3x256xf32, #tpu.memory_space<vmem>>, vector<1x256xf32>
    %c0_17 = arith.constant 0 : index
    %c0_18 = arith.constant 0 : index
    %16 = vector.load %arg5[%c0_17, %c0_18] : memref<16x9xf32, #tpu.memory_space<vmem>>, vector<16x9xf32>
    %c16_i32 = arith.constant 16 : i32
    %17 = tpu.dynamic_rotate %12 by %c16_i32 dim 1 : vector<16x256xf32>, i32 -> vector<16x256xf32>
    %c240_i32 = arith.constant 240 : i32
    %18 = tpu.dynamic_rotate %12 by %c240_i32 dim 1 : vector<16x256xf32>, i32 -> vector<16x256xf32>
    %19 = vector.extract_strided_slice %16 {offsets = [0, 0], sizes = [16, 1], strides = [1, 1]} : vector<16x9xf32> to vector<16x1xf32>
    %20 = vector.broadcast %19 : vector<16x1xf32> to vector<16x256xf32>
    %21 = arith.mulf %17, %20 : vector<16x256xf32>
    %22 = vector.extract_strided_slice %16 {offsets = [0, 3], sizes = [16, 1], strides = [1, 1]} : vector<16x9xf32> to vector<16x1xf32>
    %23 = vector.broadcast %22 : vector<16x1xf32> to vector<16x256xf32>
    %24 = arith.mulf %12, %23 : vector<16x256xf32>
    %25 = arith.addf %21, %24 : vector<16x256xf32>
    %26 = vector.extract_strided_slice %16 {offsets = [0, 6], sizes = [16, 1], strides = [1, 1]} : vector<16x9xf32> to vector<16x1xf32>
    %27 = vector.broadcast %26 : vector<16x1xf32> to vector<16x256xf32>
    %28 = arith.mulf %18, %27 : vector<16x256xf32>
    %29 = arith.addf %25, %28 : vector<16x256xf32>
    %30 = vector.extract_strided_slice %16 {offsets = [0, 1], sizes = [16, 1], strides = [1, 1]} : vector<16x9xf32> to vector<16x1xf32>
    %31 = vector.broadcast %30 : vector<16x1xf32> to vector<16x256xf32>
    %32 = arith.mulf %17, %31 : vector<16x256xf32>
    %33 = vector.extract_strided_slice %16 {offsets = [0, 4], sizes = [16, 1], strides = [1, 1]} : vector<16x9xf32> to vector<16x1xf32>
    %34 = vector.broadcast %33 : vector<16x1xf32> to vector<16x256xf32>
    %35 = arith.mulf %12, %34 : vector<16x256xf32>
    %36 = arith.addf %32, %35 : vector<16x256xf32>
    %37 = vector.extract_strided_slice %16 {offsets = [0, 7], sizes = [16, 1], strides = [1, 1]} : vector<16x9xf32> to vector<16x1xf32>
    %38 = vector.broadcast %37 : vector<16x1xf32> to vector<16x256xf32>
    %39 = arith.mulf %18, %38 : vector<16x256xf32>
    %40 = arith.addf %36, %39 : vector<16x256xf32>
    %41 = vector.extract_strided_slice %16 {offsets = [0, 2], sizes = [16, 1], strides = [1, 1]} : vector<16x9xf32> to vector<16x1xf32>
    %42 = vector.broadcast %41 : vector<16x1xf32> to vector<16x256xf32>
    %43 = arith.mulf %17, %42 : vector<16x256xf32>
    %44 = vector.extract_strided_slice %16 {offsets = [0, 5], sizes = [16, 1], strides = [1, 1]} : vector<16x9xf32> to vector<16x1xf32>
    %45 = vector.broadcast %44 : vector<16x1xf32> to vector<16x256xf32>
    %46 = arith.mulf %12, %45 : vector<16x256xf32>
    %47 = arith.addf %43, %46 : vector<16x256xf32>
    %48 = vector.extract_strided_slice %16 {offsets = [0, 8], sizes = [16, 1], strides = [1, 1]} : vector<16x9xf32> to vector<16x1xf32>
    %49 = vector.broadcast %48 : vector<16x1xf32> to vector<16x256xf32>
    %50 = arith.mulf %18, %49 : vector<16x256xf32>
    %51 = arith.addf %47, %50 : vector<16x256xf32>
    %c1_i32 = arith.constant 1 : i32
    %52 = tpu.dynamic_rotate %29 by %c1_i32 dim 1 : vector<16x256xf32>, i32 -> vector<16x256xf32>
    %53 = vector.broadcast %13 : vector<1x256xf32> to vector<16x256xf32>
    %54 = arith.mulf %52, %53 : vector<16x256xf32>
    %55 = arith.addf %40, %54 : vector<16x256xf32>
    %c255_i32 = arith.constant 255 : i32
    %56 = tpu.dynamic_rotate %51 by %c255_i32 dim 1 : vector<16x256xf32>, i32 -> vector<16x256xf32>
    %57 = vector.broadcast %14 : vector<1x256xf32> to vector<16x256xf32>
    %58 = arith.mulf %56, %57 : vector<16x256xf32>
    %59 = arith.addf %55, %58 : vector<16x256xf32>
    %60 = vector.broadcast %15 : vector<1x256xf32> to vector<16x256xf32>
    %61 = arith.mulf %59, %60 : vector<16x256xf32>
    %c0_19 = arith.constant 0 : index
    %c0_20 = arith.constant 0 : index
    %62 = vector.load %arg13[%c0_19, %c0_20] : memref<16x1xf32, #tpu.memory_space<vmem>>, vector<16x1xf32>
    %63 = arith.mulf %61, %61 : vector<16x256xf32>
    %cst_21 = arith.constant dense<0.000000e+00> : vector<16xf32>
    %64 = vector.multi_reduction <add>, %63, %cst_21 [1] : vector<16x256xf32> to vector<16xf32>
    %65 = vector.shape_cast %64 : vector<16xf32> to vector<16x1xf32>
    %66 = arith.addf %62, %65 : vector<16x1xf32>
    %c0_22 = arith.constant 0 : index
    %c0_23 = arith.constant 0 : index
    %67 = vector.load %arg13[%c0_22, %c0_23] : memref<16x1xf32, #tpu.memory_space<vmem>>, vector<16x1xf32>
    tpu.vector_store %arg13[%c0_22, %c0_23], %66 {strides = array<i32>} : memref<16x1xf32, #tpu.memory_space<vmem>>, vector<16x1xf32>,
    %68 = vector.extract_strided_slice %61 {offsets = [0, 0], sizes = [8, 256], strides = [1, 1]} : vector<16x256xf32> to vector<8x256xf32>
    %69 = vector.extract_strided_slice %61 {offsets = [8, 0], sizes = [8, 256], strides = [1, 1]} : vector<16x256xf32> to vector<8x256xf32>
    %c0_24 = arith.constant 0 : index
    %c0_25 = arith.constant 0 : index
    %70 = vector.load %arg12[%c0_24, %c0_25] : memref<8x8xf32, #tpu.memory_space<vmem>>, vector<8x8xf32>
    %cst_26 = arith.constant dense<0.000000e+00> : vector<8x8xf32>
    %71 = tpu.matmul %69, %68, %cst_26 {dimension_numbers = #tpu.dot_dimension_numbers<[1], [1], [0], [0], [0, 0, 1, 0], [], []>} : vector<8x256xf32>, vector<8x256xf32>, vector<8x8xf32> -> vector<8x8xf32>
    %72 = arith.addf %70, %71 : vector<8x8xf32>
    %c0_27 = arith.constant 0 : index
    %c0_28 = arith.constant 0 : index
    %73 = vector.load %arg12[%c0_27, %c0_28] : memref<8x8xf32, #tpu.memory_space<vmem>>, vector<8x8xf32>
    tpu.vector_store %arg12[%c0_27, %c0_28], %72 {strides = array<i32>} : memref<8x8xf32, #tpu.memory_space<vmem>>, vector<8x8xf32>,
    %c1_i32_29 = arith.constant 1 : i32
    %74 = arith.cmpi eq, %arg1, %c1_i32_29 : i32
    %75 = arith.extui %74 : i1 to i32
    %c0_i32_30 = arith.constant 0 : i32
    %76 = arith.cmpi ne, %75, %c0_i32_30 : i32
    scf.if %76 {
      %c0_31 = arith.constant 0 : index
      %c0_32 = arith.constant 0 : index
      %77 = vector.load %arg13[%c0_31, %c0_32] : memref<16x1xf32, #tpu.memory_space<vmem>>, vector<16x1xf32>
      %78 = math.sqrt %77 : vector<16x1xf32>
      %cst_33 = arith.constant 9.99999996E-13 : f32
      %79 = vector.broadcast %cst_33 : f32 to vector<16x1xf32>
      %80 = arith.maximumf %78, %79 : vector<16x1xf32>
      %cst_34 = arith.constant 1.000000e+00 : f32
      %81 = vector.broadcast %cst_34 : f32 to vector<16x1xf32>
      %82 = arith.divf %81, %80 : vector<16x1xf32>
      %83 = vector.extract_strided_slice %82 {offsets = [0, 0], sizes = [8, 1], strides = [1, 1]} : vector<16x1xf32> to vector<8x1xf32>
      %84 = vector.extract_strided_slice %82 {offsets = [8, 0], sizes = [8, 1], strides = [1, 1]} : vector<16x1xf32> to vector<8x1xf32>
      %c0_35 = arith.constant 0 : index
      %c0_36 = arith.constant 0 : index
      %85 = vector.load %arg12[%c0_35, %c0_36] : memref<8x8xf32, #tpu.memory_space<vmem>>, vector<8x8xf32>
      %c0_37 = arith.constant 0 : index
      %c0_38 = arith.constant 0 : index
      %86 = vector.load %arg7[%c0_37, %c0_38] : memref<8x1xf32, #tpu.memory_space<vmem>>, vector<8x1xf32>
      %87 = arith.mulf %84, %86 : vector<8x1xf32>
      %88 = vector.broadcast %87 : vector<8x1xf32> to vector<8x8xf32>
      %89 = arith.mulf %85, %88 : vector<8x8xf32>
      %c0_39 = arith.constant 0 : index
      %c0_40 = arith.constant 0 : index
      %90 = vector.load %arg9[%c0_39, %c0_40] : memref<8x8xf32, #tpu.memory_space<vmem>>, vector<8x8xf32>
      %91 = vector.broadcast %83 : vector<8x1xf32> to vector<8x8xf32>
      %92 = arith.mulf %90, %91 : vector<8x8xf32>
      %cst_41 = arith.constant dense<0.000000e+00> : vector<8x8xf32>
      %93 = tpu.matmul %89, %92, %cst_41 {dimension_numbers = #tpu.dot_dimension_numbers<[1], [0], [0], [1], [0, 0, 1, 1], [], []>} : vector<8x8xf32>, vector<8x8xf32>, vector<8x8xf32> -> vector<8x8xf32>
      %c0_42 = arith.constant 0 : index
      %c0_43 = arith.constant 0 : index
      %94 = vector.load %arg10[%c0_42, %c0_43] : memref<8x8xf32, #tpu.memory_space<vmem>>, vector<8x8xf32>
      %95 = arith.addf %93, %94 : vector<8x8xf32>
      %cst_44 = arith.constant dense<0xFF800000> : vector<8xf32>
      %96 = vector.multi_reduction <maximumf>, %95, %cst_44 [1] : vector<8x8xf32> to vector<8xf32>
      %97 = vector.shape_cast %96 : vector<8xf32> to vector<8x1xf32>
      %98 = vector.broadcast %97 : vector<8x1xf32> to vector<8x8xf32>
      %99 = arith.subf %95, %98 : vector<8x8xf32>
      %100 = math.exp %99 : vector<8x8xf32>
      %cst_45 = arith.constant dense<0.000000e+00> : vector<8xf32>
      %101 = vector.multi_reduction <add>, %100, %cst_45 [1] : vector<8x8xf32> to vector<8xf32>
      %102 = vector.shape_cast %101 : vector<8xf32> to vector<8x1xf32>
      %103 = vector.broadcast %102 : vector<8x1xf32> to vector<8x8xf32>
      %104 = arith.divf %100, %103 : vector<8x8xf32>
      %c0_46 = arith.constant 0 : index
      %c0_47 = arith.constant 0 : index
      %105 = vector.load %arg6[%c0_46, %c0_47] : memref<8x8xf32, #tpu.memory_space<vmem>>, vector<8x8xf32>
      %cst_48 = arith.constant dense<0.000000e+00> : vector<8x8xf32>
      %106 = tpu.matmul %105, %104, %cst_48 {dimension_numbers = #tpu.dot_dimension_numbers<[1], [0], [0], [1], [0, 0, 1, 1], [], []>} : vector<8x8xf32>, vector<8x8xf32>, vector<8x8xf32> -> vector<8x8xf32>
      %c0_49 = arith.constant 0 : index
      %c0_50 = arith.constant 0 : index
      %c0_51 = arith.constant 0 : index
      %107 = vector.load %arg11[%c0_49, %c0_50, %c0_51] : memref<1x8x8xf32, #tpu.memory_space<vmem>>, vector<1x8x8xf32>
      %108 = vector.shape_cast %107 : vector<1x8x8xf32> to vector<8x8xf32>
      %109 = vector.shape_cast %106 : vector<8x8xf32> to vector<1x8x8xf32>
      tpu.vector_store %arg11[%c0_49, %c0_50, %c0_51], %109 {strides = array<i32>} : memref<1x8x8xf32, #tpu.memory_space<vmem>>, vector<1x8x8xf32>,
    } else {
    }
    return
  }
  func.func @transform_0(%arg0: i32, %arg1: i32) -> (i32, i32, i32) {
    %c0_i32 = arith.constant 0 : i32
    %c0_i32_0 = arith.constant 0 : i32
    return %arg0, %c0_i32, %arg1 : i32, i32, i32
  }
  func.func @transform_1(%arg0: i32, %arg1: i32) -> (i32, i32, i32, i32) {
    %c0_i32 = arith.constant 0 : i32
    %c0_i32_0 = arith.constant 0 : i32
    %c0_i32_1 = arith.constant 0 : i32
    return %arg0, %arg1, %c0_i32, %c0_i32_0 : i32, i32, i32, i32
  }
  func.func @transform_2(%arg0: i32, %arg1: i32) -> (i32, i32) {
    %c0_i32 = arith.constant 0 : i32
    %c0_i32_0 = arith.constant 0 : i32
    %c0_i32_1 = arith.constant 0 : i32
    return %c0_i32, %c0_i32_0 : i32, i32
  }
  func.func @transform_3(%arg0: i32, %arg1: i32) -> (i32, i32) {
    %c0_i32 = arith.constant 0 : i32
    %c0_i32_0 = arith.constant 0 : i32
    %c0_i32_1 = arith.constant 0 : i32
    return %c0_i32, %c0_i32_0 : i32, i32
  }
  func.func @transform_4(%arg0: i32, %arg1: i32) -> (i32, i32) {
    %c0_i32 = arith.constant 0 : i32
    %c0_i32_0 = arith.constant 0 : i32
    %c0_i32_1 = arith.constant 0 : i32
    return %c0_i32, %c0_i32_0 : i32, i32
  }
  func.func @transform_5(%arg0: i32, %arg1: i32) -> (i32, i32) {
    %c0_i32 = arith.constant 0 : i32
    %c0_i32_0 = arith.constant 0 : i32
    %c0_i32_1 = arith.constant 0 : i32
    return %c0_i32, %c0_i32_0 : i32, i32
  }
  func.func @transform_6(%arg0: i32, %arg1: i32) -> (i32, i32) {
    %c0_i32 = arith.constant 0 : i32
    %c0_i32_0 = arith.constant 0 : i32
    %c0_i32_1 = arith.constant 0 : i32
    return %c0_i32, %c0_i32_0 : i32, i32
  }
  func.func @transform_7(%arg0: i32, %arg1: i32) -> (i32, i32) {
    %c0_i32 = arith.constant 0 : i32
    %c0_i32_0 = arith.constant 0 : i32
    %c0_i32_1 = arith.constant 0 : i32
    return %c0_i32, %c0_i32_0 : i32, i32
  }
  func.func @transform_8(%arg0: i32, %arg1: i32) -> (i32, i32) {
    %c0_i32 = arith.constant 0 : i32
    %c0_i32_0 = arith.constant 0 : i32
    %c0_i32_1 = arith.constant 0 : i32
    return %c0_i32, %c0_i32_0 : i32, i32
  }
  func.func @transform_9(%arg0: i32, %arg1: i32) -> (i32, i32, i32) {
    %c0_i32 = arith.constant 0 : i32
    %c0_i32_0 = arith.constant 0 : i32
    %c0_i32_1 = arith.constant 0 : i32
    return %arg0, %c0_i32, %c0_i32_0 : i32, i32, i32
  }
}

</mosaic_0001>

<llo_original>
// kernel: tpu_custom_call.1
$region0: #{tpu_custom_call.1}
  #allocation0 [shape = 'u32[]', space=smem, size = 0x4, offset = 0x4, fixed_abs, tag = 'smem constant byte address 0x4 - core index']
  #allocation1 [shape = 'u32[144,128]{1,0:T(1,128)}', space=vmem, size = 0x12000, scoped, tag = 'internal scratch']
  #allocation2 [shape = 'f32[8,8]{1,0:T(8,128)}', space=vmem, size = 0x1000, scoped, tag = 'scratch operand']
  #allocation3 [shape = 'f32[16,1]{1,0:T(8,128)}', space=vmem, size = 0x2000, scoped, tag = 'scratch operand']
  %s0 = inlined_call_operand.vmem [shape: f32[2,8,256], index: 0, kind: input, shape index: {}]
  %s1 = inlined_call_operand.hbm [shape: f32[2,2,8,32], index: 1, kind: input, shape index: {}]
  %s2 = inlined_call_operand.vmem [shape: f32[16,8], index: 2, kind: input, shape index: {}]
  %s3 = inlined_call_operand.hbm [shape: f32[16,9], index: 3, kind: input, shape index: {}]
  %s4 = inlined_call_operand.vmem [shape: f32[8,8], index: 4, kind: input, shape index: {}]
  %s5 = inlined_call_operand.vmem [shape: f32[8,1], index: 5, kind: input, shape index: {}]
  %s6 = inlined_call_operand.hbm [shape: f32[3,256], index: 6, kind: input, shape index: {}]
  %s7 = inlined_call_operand.vmem [shape: f32[8,8], index: 7, kind: input, shape index: {}]
  %s8 = inlined_call_operand.hbm [shape: f32[8,8], index: 8, kind: input, shape index: {}]
  %s9 = inlined_call_operand.hbm [shape: f32[2,8,8], index: 9, kind: output, shape index: {}]
  %s10 = sld [smem:[#allocation0]]
  $region93: #{tpu_custom_call.1} parent=0
    _
  %s12 = ssub.s32 1, %s10
  %s13 = scalar_select 0, %s12, %s10
  $region1: #{tpu_custom_call.1} parent=0
    #allocation4 [shape = 'u8[8192]{0}', space=vmem, size = 0x2000, scoped, tag = 'input window, operand 1']
    #allocation5 [shape = 's32[2]{0}', space=sflag, size = 0x8, scoped, tag = 'scoped memory for tpu_custom_call.1']
    #allocation6 [shape = 's32[2]{0}', space=sflag, size = 0x8, scoped, tag = 'scoped memory for tpu_custom_call.1']
    #allocation7 [shape = 'u8[8192]{0}', space=vmem, size = 0x2000, scoped, tag = 'input window, operand 3, single buffered']
    #allocation8 [shape = 's32[1]{0}', space=sflag, size = 0x4, scoped, tag = 'scoped memory for tpu_custom_call.1']
    #allocation9 [shape = 'u8[4096]{0}', space=vmem, size = 0x1000, scoped, tag = 'input window, operand 6, single buffered']
    #allocation10 [shape = 'u8[4096]{0}', space=vmem, size = 0x1000, scoped, tag = 'input window, operand 8, single buffered']
    #allocation11 [shape = 's32[1]{0}', space=sflag, size = 0x4, scoped, tag = 'scoped memory for tpu_custom_call.1']
    #allocation12 [shape = 'u8[8192]{0}', space=vmem, size = 0x2000, scoped, tag = 'output window, operand 0']
    %14 = vsyncpa [#allocation5], 0
    %s15 = scalar_lea.sflag [#allocation5], 1
    %16 = vsyncpa %s15, 0
    %17 = vsyncpa [#allocation8], 0
    %18 = vsyncpa [#allocation11], 0
    %19 = vsyncpa [#allocation6], 0
    %s20 = scalar_lea.sflag [#allocation6], 1
    %21 = vsyncpa %s20, 0
    loop: start=0, step=1, limit=6
    $region2: #{tpu_custom_call.1} parent=1 // loop_pre_header
      _
    $region3: #{tpu_custom_call.1} parent=1 // loop_header
      %s23 = sphi 0, %s27
      %p24 = scmp.ge.s32.totalorder %s23, 6
      %s30 = sphi 0, %s42
      %s31 = sphi 0, %s38
      %s32 = sphi 0, %s30
      %s33 = sphi 0, %s31
      %s34 = sphi 0, %s32
      %s35 = sphi 0, %s33
      %s47 = sphi 0, %s49
      %s50 = sphi 0, %s47
      %s51 = sphi 0, %s50
      %s67 = sphi 0, %s51
      %s75 = sphi 0, %s77
      %s78 = sphi 0, %s75
      %s79 = sphi 0, %s78
      %s95 = sphi 0, %s79
      %s99 = sphi 0, %s99
      %s101 = sphi 0, %s99
      %s102 = sphi 0, %s101
      %s116 = sphi 0, %s102
      %s120 = sphi 0, %s120
      %s122 = sphi 0, %s120
      %s123 = sphi 0, %s122
      %s137 = sphi 0, %s123
      %s141 = sphi 0, %s141
      %s143 = sphi 0, %s141
      %s144 = sphi 0, %s143
      %s158 = sphi 0, %s144
      %s162 = sphi 0, %s162
      %s164 = sphi 0, %s162
      %s165 = sphi 0, %s164
      %s179 = sphi 0, %s165
      %s183 = sphi 0, %s183
      %s185 = sphi 0, %s183
      %s186 = sphi 0, %s185
      %s200 = sphi 0, %s186
      %s204 = sphi 0, %s204
      %s206 = sphi 0, %s204
      %s207 = sphi 0, %s206
      %s221 = sphi 0, %s207
      %s225 = sphi 0, %s225
      %s227 = sphi 0, %s225
      %s228 = sphi 0, %s227
      %s242 = sphi 0, %s228
      %s248 = sphi 0, %s250
      %s251 = sphi 0, %s248
      %s252 = sphi 0, %s251
      %s268 = sphi 0, %s252
    $region4: #{tpu_custom_call.1} parent=1 // loop_header_branch
      %26 = sbr.rel (%p24) target = $region8
    $region5: #{tpu_custom_call.1} parent=1 // loop_body
      %s28 = ssub.s32 %s23, 1
      %s29 = ssub.s32 %s23, 2
      %s36 = sadd.s32 1, %s31
      %p37 = scmp.ge.s32.totalorder %s36, 2
      %s38 = scalar_select %p37, 0, %s36
      %s39 = sadd.s32 1, %s30
      %s40 = scalar_select %p37, %s39, %s30
      %p41 = scmp.ge.s32.totalorder %s40, 2
      %s42 = scalar_select %p41, 0, %s40
      %s43 = ssub.s32 %s30, %s42
      %s44 = ssub.s32 %s31, %s38
      %s45 = sor.u32 %s43, %s44
      %p46 = scmp.eq.s32.totalorder %s45, 0
      %s48 = sadd.s32 %s47, 1
      %s49 = scalar_select %p46, %s47, %s48
      %p52 = pneg %p46
      %p53 = scmp.eq.s32.totalorder %s23, 3
      %p54 = por %p52, %p53
      %p55 = scmp.ne.s32.totalorder %s47, %s50
      %p56 = scmp.eq.s32.totalorder %s23, 0
      %p57 = por %p55, %p56
      %p58 = scmp.ne.s32.totalorder %s47, %s50
      %p59 = scmp.eq.s32.totalorder %s28, 3
      %p60 = por %p58, %p59
      %p61 = scmp.ne.s32.totalorder %s50, %s51
      %p62 = scmp.eq.s32.totalorder %s28, 0
      %p63 = por %p61, %p62
      %p64 = scmp.ne.s32.totalorder %s50, %s51
      %p65 = scmp.eq.s32.totalorder %s29, 3
      %p66 = por %p64, %p65
      %p68 = scmp.ne.s32.totalorder %s51, %s67
      %p69 = scmp.eq.s32.totalorder %s29, 0
      %p70 = por %p68, %p69
      %s71 = ssub.s32 %s30, %s42
      %s72 = ssub.s32 %s31, %s38
      %s73 = sor.u32 %s71, %s72
      %p74 = scmp.eq.s32.totalorder %s73, 0
      %s76 = sadd.s32 %s75, 1
      %s77 = scalar_select %p74, %s75, %s76
      %p80 = pneg %p74
      %p81 = scmp.eq.s32.totalorder %s23, 3
      %p82 = por %p80, %p81
      %p83 = scmp.ne.s32.totalorder %s75, %s78
      %p84 = scmp.eq.s32.totalorder %s23, 0
      %p85 = por %p83, %p84
      %p86 = scmp.ne.s32.totalorder %s75, %s78
      %p87 = scmp.eq.s32.totalorder %s28, 3
      %p88 = por %p86, %p87
      %p89 = scmp.ne.s32.totalorder %s78, %s79
      %p90 = scmp.eq.s32.totalorder %s28, 0
      %p91 = por %p89, %p90
      %p92 = scmp.ne.s32.totalorder %s78, %s79
      %p93 = scmp.eq.s32.totalorder %s29, 3
      %p94 = por %p92, %p93
      %p96 = scmp.ne.s32.totalorder %s79, %s95
      %p97 = scmp.eq.s32.totalorder %s29, 0
      %p98 = por %p96, %p97
      %s100 = sadd.s32 %s99, 1
      %p103 = scmp.eq.s32.totalorder %s23, 3
      %p104 = scmp.ne.s32.totalorder %s99, %s101
      %p105 = scmp.eq.s32.totalorder %s23, 0
      %p106 = por %p104, %p105
      %p107 = scmp.ne.s32.totalorder %s99, %s101
      %p108 = scmp.eq.s32.totalorder %s28, 3
      %p109 = por %p107, %p108
      %p110 = scmp.ne.s32.totalorder %s101, %s102
      %p111 = scmp.eq.s32.totalorder %s28, 0
      %p112 = por %p110, %p111
      %p113 = scmp.ne.s32.totalorder %s101, %s102
      %p114 = scmp.eq.s32.totalorder %s29, 3
      %p115 = por %p113, %p114
      %p117 = scmp.ne.s32.totalorder %s102, %s116
      %p118 = scmp.eq.s32.totalorder %s29, 0
      %p119 = por %p117, %p118
      %s121 = sadd.s32 %s120, 1
      %p124 = scmp.eq.s32.totalorder %s23, 3
      %p125 = scmp.ne.s32.totalorder %s120, %s122
      %p126 = scmp.eq.s32.totalorder %s23, 0
      %p127 = por %p125, %p126
      %p128 = scmp.ne.s32.totalorder %s120, %s122
      %p129 = scmp.eq.s32.totalorder %s28, 3
      %p130 = por %p128, %p129
      %p131 = scmp.ne.s32.totalorder %s122, %s123
      %p132 = scmp.eq.s32.totalorder %s28, 0
      %p133 = por %p131, %p132
      %p134 = scmp.ne.s32.totalorder %s122, %s123
      %p135 = scmp.eq.s32.totalorder %s29, 3
      %p136 = por %p134, %p135
      %p138 = scmp.ne.s32.totalorder %s123, %s137
      %p139 = scmp.eq.s32.totalorder %s29, 0
      %p140 = por %p138, %p139
      %s142 = sadd.s32 %s141, 1
      %p145 = scmp.eq.s32.totalorder %s23, 3
      %p146 = scmp.ne.s32.totalorder %s141, %s143
      %p147 = scmp.eq.s32.totalorder %s23, 0
      %p148 = por %p146, %p147
      %p149 = scmp.ne.s32.totalorder %s141, %s143
      %p150 = scmp.eq.s32.totalorder %s28, 3
      %p151 = por %p149, %p150
      %p152 = scmp.ne.s32.totalorder %s143, %s144
      %p153 = scmp.eq.s32.totalorder %s28, 0
      %p154 = por %p152, %p153
      %p155 = scmp.ne.s32.totalorder %s143, %s144
      %p156 = scmp.eq.s32.totalorder %s29, 3
      %p157 = por %p155, %p156
      %p159 = scmp.ne.s32.totalorder %s144, %s158
      %p160 = scmp.eq.s32.totalorder %s29, 0
      %p161 = por %p159, %p160
      %s163 = sadd.s32 %s162, 1
      %p166 = scmp.eq.s32.totalorder %s23, 3
      %p167 = scmp.ne.s32.totalorder %s162, %s164
      %p168 = scmp.eq.s32.totalorder %s23, 0
      %p169 = por %p167, %p168
      %p170 = scmp.ne.s32.totalorder %s162, %s164
      %p171 = scmp.eq.s32.totalorder %s28, 3
      %p172 = por %p170, %p171
      %p173 = scmp.ne.s32.totalorder %s164, %s165
      %p174 = scmp.eq.s32.totalorder %s28, 0
      %p175 = por %p173, %p174
      %p176 = scmp.ne.s32.totalorder %s164, %s165
      %p177 = scmp.eq.s32.totalorder %s29, 3
      %p178 = por %p176, %p177
      %p180 = scmp.ne.s32.totalorder %s165, %s179
      %p181 = scmp.eq.s32.totalorder %s29, 0
      %p182 = por %p180, %p181
      %s184 = sadd.s32 %s183, 1
      %p187 = scmp.eq.s32.totalorder %s23, 3
      %p188 = scmp.ne.s32.totalorder %s183, %s185
      %p189 = scmp.eq.s32.totalorder %s23, 0
      %p190 = por %p188, %p189
      %p191 = scmp.ne.s32.totalorder %s183, %s185
      %p192 = scmp.eq.s32.totalorder %s28, 3
      %p193 = por %p191, %p192
      %p194 = scmp.ne.s32.totalorder %s185, %s186
      %p195 = scmp.eq.s32.totalorder %s28, 0
      %p196 = por %p194, %p195
      %p197 = scmp.ne.s32.totalorder %s185, %s186
      %p198 = scmp.eq.s32.totalorder %s29, 3
      %p199 = por %p197, %p198
      %p201 = scmp.ne.s32.totalorder %s186, %s200
      %p202 = scmp.eq.s32.totalorder %s29, 0
      %p203 = por %p201, %p202
      %s205 = sadd.s32 %s204, 1
      %p208 = scmp.eq.s32.totalorder %s23, 3
      %p209 = scmp.ne.s32.totalorder %s204, %s206
      %p210 = scmp.eq.s32.totalorder %s23, 0
      %p211 = por %p209, %p210
      %p212 = scmp.ne.s32.totalorder %s204, %s206
      %p213 = scmp.eq.s32.totalorder %s28, 3
      %p214 = por %p212, %p213
      %p215 = scmp.ne.s32.totalorder %s206, %s207
      %p216 = scmp.eq.s32.totalorder %s28, 0
      %p217 = por %p215, %p216
      %p218 = scmp.ne.s32.totalorder %s206, %s207
      %p219 = scmp.eq.s32.totalorder %s29, 3
      %p220 = por %p218, %p219
      %p222 = scmp.ne.s32.totalorder %s207, %s221
      %p223 = scmp.eq.s32.totalorder %s29, 0
      %p224 = por %p222, %p223
      %s226 = sadd.s32 %s225, 1
      %p229 = scmp.eq.s32.totalorder %s23, 3
      %p230 = scmp.ne.s32.totalorder %s225, %s227
      %p231 = scmp.eq.s32.totalorder %s23, 0
      %p232 = por %p230, %p231
      %p233 = scmp.ne.s32.totalorder %s225, %s227
      %p234 = scmp.eq.s32.totalorder %s28, 3
      %p235 = por %p233, %p234
      %p236 = scmp.ne.s32.totalorder %s227, %s228
      %p237 = scmp.eq.s32.totalorder %s28, 0
      %p238 = por %p236, %p237
      %p239 = scmp.ne.s32.totalorder %s227, %s228
      %p240 = scmp.eq.s32.totalorder %s29, 3
      %p241 = por %p239, %p240
      %p243 = scmp.ne.s32.totalorder %s228, %s242
      %p244 = scmp.eq.s32.totalorder %s29, 0
      %p245 = por %p243, %p244
      %s246 = ssub.s32 %s30, %s42
      %p247 = scmp.eq.s32.totalorder %s246, 0
      %s249 = sadd.s32 %s248, 1
      %s250 = scalar_select %p247, %s248, %s249
      %p253 = pneg %p247
      %p254 = scmp.eq.s32.totalorder %s23, 3
      %p255 = por %p253, %p254
      %p256 = scmp.ne.s32.totalorder %s248, %s251
      %p257 = scmp.eq.s32.totalorder %s23, 0
      %p258 = por %p256, %p257
      %p259 = scmp.ne.s32.totalorder %s248, %s251
      %p260 = scmp.eq.s32.totalorder %s28, 3
      %p261 = por %p259, %p260
      %p262 = scmp.ne.s32.totalorder %s251, %s252
      %p263 = scmp.eq.s32.totalorder %s28, 0
      %p264 = por %p262, %p263
      %p265 = scmp.ne.s32.totalorder %s251, %s252
      %p266 = scmp.eq.s32.totalorder %s29, 3
      %p267 = por %p265, %p266
      %p269 = scmp.ne.s32.totalorder %s252, %s268
      %p270 = scmp.eq.s32.totalorder %s29, 0
      %p271 = por %p269, %p270
      %p272 = scmp.le.s32.totalorder 1, %s23
      %p273 = scmp.lt.s32.totalorder %s23, 5
      %p274 = pnand %p272, %p273
      %p275 = pneg %p274
      // Predicated region
      $region9: #{tpu_custom_call.1} parent=5 // pred_check
        _
      $region10: #{tpu_custom_call.1} parent=5 // pred_check_branch
        %277 = sbr.rel (%p274) target = $region12
      $region11: #{tpu_custom_call.1} parent=5 // pred_region
        %s278 = ssub.s32 %s23, 1
        // Predicated region
        $region13: #{tpu_custom_call.1} parent=11 // pred_check
          %p279 = pneg %p112
        $region14: #{tpu_custom_call.1} parent=11 // pred_check_branch
          %281 = sbr.rel (%p279) target = $region16
        $region15: #{tpu_custom_call.1} parent=11 // pred_region
          _
        $region16: #{tpu_custom_call.1} parent=11 // pred_fallthru
          _
        // Predicated region
        $region17: #{tpu_custom_call.1} parent=11 // pred_check
          %p282 = pneg %p133
        $region18: #{tpu_custom_call.1} parent=11 // pred_check_branch
          %284 = sbr.rel (%p282) target = $region20
        $region19: #{tpu_custom_call.1} parent=11 // pred_region
          %s286 = ssub.s32 256, 256
          %287 = vsyncadd [#allocation8], %s286
          %s288 = sshll.u32 [#allocation7], 4
          %s289 = int_to_ptr.vmem [resolvable:$true] %s288
          %294 = dma.hbm_to_vmem [thread:$0]  %s3, 256, %s289, [#allocation8], 128, 128, 8
        $region20: #{tpu_custom_call.1} parent=11 // pred_fallthru
          _
        // Predicated region
        $region21: #{tpu_custom_call.1} parent=11 // pred_check
          %p295 = pneg %p154
        $region22: #{tpu_custom_call.1} parent=11 // pred_check_branch
          %297 = sbr.rel (%p295) target = $region24
        $region23: #{tpu_custom_call.1} parent=11 // pred_region
          _
        $region24: #{tpu_custom_call.1} parent=11 // pred_fallthru
          _
        // Predicated region
        $region25: #{tpu_custom_call.1} parent=11 // pred_check
          %p298 = pneg %p175
        $region26: #{tpu_custom_call.1} parent=11 // pred_check_branch
          %300 = sbr.rel (%p298) target = $region28
        $region27: #{tpu_custom_call.1} parent=11 // pred_region
          _
        $region28: #{tpu_custom_call.1} parent=11 // pred_fallthru
          _
        // Predicated region
        $region29: #{tpu_custom_call.1} parent=11 // pred_check
          %p301 = pneg %p196
        $region30: #{tpu_custom_call.1} parent=11 // pred_check_branch
          %303 = sbr.rel (%p301) target = $region32
        $region31: #{tpu_custom_call.1} parent=11 // pred_region
          %s305 = ssub.s32 128, 128
          %306 = vsyncadd [#allocation8], %s305
          %s308 = sshll.u32 [#allocation9], 4
          %s309 = int_to_ptr.vmem [resolvable:$true] %s308
          %311 = dma.hbm_to_vmem [thread:$0]  %s6, 128, %s309, [#allocation8]
        $region32: #{tpu_custom_call.1} parent=11 // pred_fallthru
          _
        // Predicated region
        $region33: #{tpu_custom_call.1} parent=11 // pred_check
          %p312 = pneg %p217
        $region34: #{tpu_custom_call.1} parent=11 // pred_check_branch
          %314 = sbr.rel (%p312) target = $region36
        $region35: #{tpu_custom_call.1} parent=11 // pred_region
          _
        $region36: #{tpu_custom_call.1} parent=11 // pred_fallthru
          _
        // Predicated region
        $region37: #{tpu_custom_call.1} parent=11 // pred_check
          %p315 = pneg %p238
        $region38: #{tpu_custom_call.1} parent=11 // pred_check_branch
          %317 = sbr.rel (%p315) target = $region40
        $region39: #{tpu_custom_call.1} parent=11 // pred_region
          %s319 = ssub.s32 128, 128
          %320 = vsyncadd [#allocation11], %s319
          %s322 = sshll.u32 [#allocation10], 4
          %s323 = int_to_ptr.vmem [resolvable:$true] %s322
          %325 = dma.hbm_to_vmem [thread:$0]  %s8, 128, %s323, [#allocation11]
        $region40: #{tpu_custom_call.1} parent=11 // pred_fallthru
          _
      $region12: #{tpu_custom_call.1} parent=5 // pred_fallthru
        _
      %p326 = scmp.lt.s32.totalorder %s23, 4
      // Predicated region
      $region41: #{tpu_custom_call.1} parent=5 // pred_check
        %p327 = pneg %p326
      $region42: #{tpu_custom_call.1} parent=5 // pred_check_branch
        %329 = sbr.rel (%p327) target = $region44
      $region43: #{tpu_custom_call.1} parent=5 // pred_region
        // Predicated region
        $region45: #{tpu_custom_call.1} parent=43 // pred_check
          %p330 = pneg %p57
        $region46: #{tpu_custom_call.1} parent=43 // pred_check_branch
          %332 = sbr.rel (%p330) target = $region48
        $region47: #{tpu_custom_call.1} parent=43 // pred_region
          %p333 = scmp.lt.s32.totalorder %s30, 1
          %s334 = scalar_select %p333, %s30, 1
          %p335 = scmp.lt.s32.totalorder %s31, 1
          %s336 = scalar_select %p335, %s31, 1
          %s337 = smul.addr %s334, 2
          %s338 = sadd.s32 %s336, %s337
          %s339 = smul.addr %s338, 8
          %s340 = scalar_lea.vmem %s0, %s339
        $region48: #{tpu_custom_call.1} parent=43 // pred_fallthru
          _
        // Predicated region
        $region49: #{tpu_custom_call.1} parent=43 // pred_check
          %p341 = pneg %p85
        $region50: #{tpu_custom_call.1} parent=43 // pred_check_branch
          %343 = sbr.rel (%p341) target = $region52
        $region51: #{tpu_custom_call.1} parent=43 // pred_region
          %s344 = sand.u32 %s75, 1
          %s345 = scalar_lea.sflag [#allocation5], %s344
          %s346 = sand.u32 %s75, 1
          %s347 = smul.addr %s346, 8
          %s348 = scalar_lea.vmem [#allocation4], %s347
          %s350 = ssub.s32 128, 128
          %351 = vsyncadd %s345, %s350
          %s352 = smul.addr %s30, 2
          %s353 = sadd.s32 %s31, %s352
          %s354 = smul.addr %s353, 128
          %s355 = scalar_lea.hbm %s1, %s354
          %s357 = sshll.u32 %s348, 4
          %s358 = int_to_ptr.vmem [resolvable:$true] %s357
          %360 = dma.hbm_to_vmem [thread:$0]  %s355, 128, %s358, %s345
        $region52: #{tpu_custom_call.1} parent=43 // pred_fallthru
          _
      $region44: #{tpu_custom_call.1} parent=5 // pred_fallthru
        _
      %p361 = scmp.le.s32.totalorder 1, %s23
      %p362 = scmp.lt.s32.totalorder %s23, 5
      %p363 = pnand %p361, %p362
      %p364 = pneg %p363
      // Predicated region
      $region53: #{tpu_custom_call.1} parent=5 // pred_check
        _
      $region54: #{tpu_custom_call.1} parent=5 // pred_check_branch
        %366 = sbr.rel (%p363) target = $region56
      $region55: #{tpu_custom_call.1} parent=5 // pred_region
        %s367 = ssub.s32 %s23, 1
        %s368 = sand.u32 %s78, 1
        %s369 = scalar_lea.sflag [#allocation5], %s368
        %s370 = sand.u32 %s78, 1
        %s371 = smul.addr %s370, 8
        %s372 = scalar_lea.vmem [#allocation4], %s371
        // Predicated region
        $region57: #{tpu_custom_call.1} parent=55 // pred_check
          %p373 = pneg %p91
        $region58: #{tpu_custom_call.1} parent=55 // pred_check_branch
          %375 = sbr.rel (%p373) target = $region60
        $region59: #{tpu_custom_call.1} parent=55 // pred_region
          %376 = dma.done %s369, 128
        $region60: #{tpu_custom_call.1} parent=55 // pred_fallthru
          _
        // Predicated region
        $region61: #{tpu_custom_call.1} parent=55 // pred_check
          %p377 = pneg %p133
        $region62: #{tpu_custom_call.1} parent=55 // pred_check_branch
          %379 = sbr.rel (%p377) target = $region64
        $region63: #{tpu_custom_call.1} parent=55 // pred_region
          %380 = dma.done [#allocation8], 256
        $region64: #{tpu_custom_call.1} parent=55 // pred_fallthru
          _
        // Predicated region
        $region65: #{tpu_custom_call.1} parent=55 // pred_check
          %p381 = pneg %p196
        $region66: #{tpu_custom_call.1} parent=55 // pred_check_branch
          %383 = sbr.rel (%p381) target = $region68
        $region67: #{tpu_custom_call.1} parent=55 // pred_region
          %384 = dma.done [#allocation8], 128
        $region68: #{tpu_custom_call.1} parent=55 // pred_fallthru
          _
        // Predicated region
        $region69: #{tpu_custom_call.1} parent=55 // pred_check
          %p385 = pneg %p238
        $region70: #{tpu_custom_call.1} parent=55 // pred_check_branch
          %387 = sbr.rel (%p385) target = $region72
        $region71: #{tpu_custom_call.1} parent=55 // pred_region
          %388 = dma.done [#allocation11], 128
        $region72: #{tpu_custom_call.1} parent=55 // pred_fallthru
          _
        %p389 = scmp.lt.s32.totalorder %s32, 1
        %s390 = scalar_select %p389, %s32, 1
        %p391 = scmp.lt.s32.totalorder %s33, 1
        %s392 = scalar_select %p391, %s33, 1
        %s393 = smul.addr %s390, 2
        %s394 = sadd.s32 %s392, %s393
        %s395 = smul.addr %s394, 8
        %s396 = scalar_lea.vmem %s0, %s395
        %p397 = pneg %p63
        %p398 = pneg %p60
        %s399 = sand.u32 %s78, 1
        %s400 = scalar_lea.sflag [#allocation5], %s399
        %s401 = sand.u32 %s78, 1
        %s402 = smul.addr %s401, 8
        %s403 = scalar_lea.vmem [#allocation4], %s402
        %p404 = pneg %p91
        %p405 = pneg %p88
        %p406 = pneg %p112
        %p407 = pneg %p109
        %p408 = pneg %p133
        %p409 = pneg %p130
        %p410 = pneg %p154
        %p411 = pneg %p151
        %p412 = pneg %p175
        %p413 = pneg %p172
        %p414 = pneg %p196
        %p415 = pneg %p193
        %p416 = pneg %p217
        %p417 = pneg %p214
        %p418 = pneg %p238
        %p419 = pneg %p235
        %p420 = pneg %p264
        %p421 = pneg %p261
        %s422 = sand.u32 %s251, 1
        %s423 = scalar_lea.sflag [#allocation6], %s422
        %s424 = sand.u32 %s251, 1
        %s425 = smul.addr %s424, 8
        %s426 = scalar_lea.vmem [#allocation12], %s425
        %p427 = scmp.lt.s32.totalorder %s32, 1
        %s428 = scalar_select %p427, %s32, 1
        %p429 = scmp.lt.s32.totalorder %s33, 1
        %s430 = scalar_select %p429, %s33, 1
        %s431 = smul.addr %s428, 2
        %s432 = sadd.s32 %s430, %s431
        %s433 = smul.addr %s432, 8
        %s434 = scalar_lea.vmem %s0, %s433
        %p435 = scmp.eq.s32.totalorder %s33, 0
        // Predicated region
        $region73: #{tpu_custom_call.1} parent=55 // pred_check
          %p436 = pneg %p435
        $region74: #{tpu_custom_call.1} parent=55 // pred_check_branch
          %438 = sbr.rel (%p436) target = $region76
        $region75: #{tpu_custom_call.1} parent=55 // pred_region
          %vm439 = vcmask 64512
          %440 = vst.msk [vmem:[#allocation2] sm:$0xff] %vm439, 0.0
          %vm441 = vcmask 7168
          %442 = vst.msk [vmem:[#allocation3] sm:$0xff] %vm441, 0.0
          %443 = vst.msk [vmem:[#allocation3 + $0x8] sm:$0xff] %vm441, 0.0
        $region76: #{tpu_custom_call.1} parent=55 // pred_fallthru
          _
        %v444 = vld [vmem:[%s372] sm:$0xff]
        %v445 = vld [vmem:[%s434] sm:$0xff]
        %447 = vrot.lane.b32.xlu0 %v445, 16
        %v448 = vpop.permute.xlu0 %447
        %vm450 = vcmask 130048
        %v451 = vsel %vm450, %v444, %v448
        %v452 = vsel %vm450, %v448, %v444
        %vm453 = vcmask 261120
        %v454 = vsel %vm453, %v452, 0.0
        %v455 = vld [vmem:[%s2] sm:$0xff]
        %v456 = vld [vmem:[%s2 + $0x8] sm:$0xff]
        %vm457 = vcmask 64512
        %v459 = vsel %vm457, %v455, 0
        %v462 = vsel %vm457, %v456, 0
        %464 = vmatprep.subr.mxu0 %v454
        %465 = vmatpush1.msra.mxu0 %v451
        %466 = vmatprep.subr.mxu0 0.0
        %467 = vmatpush1.msra.mxu0 0.0
        %468 = vmatprep.subr.mxu0 0.0
        %469 = vmatpush1.msra.mxu0 0.0
        %470 = vmatprep.subr.mxu0 0.0
        %471 = vmatpush1.msra.mxu0 0.0
        %472 = vmatprep.subr.mxu0 0.0
        %473 = vmatpush1.msra.mxu0 0.0
        %474 = vmatprep.subr.mxu0 0.0
        %475 = vmatpush1.msra.mxu0 0.0
        %476 = vmatprep.subr.mxu0 0.0
        %477 = vmatpush1.msra.mxu0 0.0
        %478 = vmatprep.subr.mxu0 0.0
        %479 = vmatpush1.msra.mxu0 0.0
        %480 = vmatprep.subr.mxu0 0.0
        %481 = vmatpush1.msra.mxu0 0.0
        %482 = vmatprep.subr.mxu0 0.0
        %483 = vmatpush1.msra.mxu0 0.0
        %484 = vmatprep.subr.mxu0 0.0
        %485 = vmatpush1.msra.mxu0 0.0
        %486 = vmatprep.subr.mxu0 0.0
        %487 = vmatpush1.msra.mxu0 0.0
        %488 = vmatprep.subr.mxu0 0.0
        %489 = vmatpush1.msra.mxu0 0.0
        %490 = vmatprep.subr.mxu0 0.0
        %491 = vmatpush1.msra.mxu0 0.0
        %492 = vmatprep.subr.mxu0 0.0
        %493 = vmatpush1.msra.mxu0 0.0
        %494 = vmatprep.subr.mxu0 0.0
        %495 = vmatpush1.msra.mxu0 0.0
        %496 = vmatprep.subr.mxu0 0.0
        %497 = vmatpush1.msra.mxu0 0.0
        %498 = vmatprep.subr.mxu0 0.0
        %499 = vmatpush1.msra.mxu0 0.0
        %500 = vmatprep.subr.mxu0 0.0
        %501 = vmatpush1.msra.mxu0 0.0
        %502 = vmatprep.subr.mxu0 0.0
        %503 = vmatpush1.msra.mxu0 0.0
        %504 = vmatprep.subr.mxu0 0.0
        %505 = vmatpush1.msra.mxu0 0.0
        %506 = vmatprep.subr.mxu0 0.0
        %507 = vmatpush1.msra.mxu0 0.0
        %508 = vmatprep.subr.mxu0 0.0
        %509 = vmatpush1.msra.mxu0 0.0
        %510 = vmatprep.subr.mxu0 0.0
        %511 = vmatpush1.msra.mxu0 0.0
        %512 = vmatprep.subr.mxu0 0.0
        %513 = vmatpush1.msra.mxu0 0.0
        %514 = vmatprep.subr.mxu0 0.0
        %515 = vmatpush1.msra.mxu0 0.0
        %516 = vmatprep.subr.mxu0 0.0
        %517 = vmatpush1.msra.mxu0 0.0
        %518 = vmatprep.subr.mxu0 0.0
        %519 = vmatpush1.msra.mxu0 0.0
        %520 = vmatprep.subr.mxu0 0.0
        %521 = vmatpush1.msra.mxu0 0.0
        %522 = vmatprep.subr.mxu0 0.0
        %523 = vmatpush1.msra.mxu0 0.0
        %524 = vmatprep.subr.mxu0 0.0
        %525 = vmatpush1.msra.mxu0 0.0
        %526 = vmatprep.subr.mxu0 0.0
        %527 = vmatpush1.msra.mxu0 0.0
        %528 = vmatprep.mubr.f32.mxu0 0.0
        %529 = vmatmul.mubr.f32.gmra.mrb[0].mxu0 %v459
        %v530 = vpop.f32.mrb[0].mxu0
        %v531 = vadd.f32 0.0, %v530
        %v532 = vpop.f32.mrb[0].mxu0
        %v533 = vadd.f32 0.0, %v532
        %534 = vmatprep.mubr.f32.mxu0 0.0
        %535 = vmatmul.mubr.f32.gmra.mrb[0].mxu0 %v462
        %v536 = vpop.f32.mrb[0].mxu0
        %v537 = vadd.f32 0.0, %v536
        %v538 = vpop.f32.mrb[0].mxu0
        %v539 = vadd.f32 0.0, %v538
        %540 = vdwg.mxu0
        %v541 = vld [vmem:[#allocation9] ss:$4 sm:$0x3]
        %s542 = scalar_lea.vmem [#allocation9], 1
        %v543 = vld [vmem:[%s542] ss:$4 sm:$0x3]
        %s544 = scalar_lea.vmem [#allocation9], 2
        %v545 = vld [vmem:[%s544] ss:$4 sm:$0x3]
        %v546 = vld [vmem:[#allocation7] sm:$0xff]
        %v547 = vld [vmem:[#allocation7 + $0x8] sm:$0xff]
        %548 = vrot.lane.b32.xlu0 %v531, 16
        %v549 = vpop.permute.xlu0 %548
        %550 = vrot.lane.b32.xlu0 %v537, 16
        %v551 = vpop.permute.xlu0 %550
        %552 = vrot.lane.b32.xlu0 %v533, 16
        %v553 = vpop.permute.xlu0 %552
        %554 = vrot.lane.b32.xlu0 %v539, 16
        %v555 = vpop.permute.xlu0 %554
        %v556 = vlaneseq
        %v557 = vand.u32 %v556, 127
        %vm558 = vcmp.lt.s32.totalorder %v557, 16
        %v559 = vsel %vm558, %v549, %v553
        %v560 = vsel %vm558, %v551, %v555
        %v561 = vsel %vm558, %v553, %v549
        %v562 = vsel %vm558, %v555, %v551
        %563 = vrot.lane.b32.xlu0 %v531, 112
        %v564 = vpop.permute.xlu0 %563
        %565 = vrot.lane.b32.xlu0 %v537, 112
        %v566 = vpop.permute.xlu0 %565
        %567 = vrot.lane.b32.xlu0 %v533, 112
        %v568 = vpop.permute.xlu0 %567
        %569 = vrot.lane.b32.xlu0 %v539, 112
        %v570 = vpop.permute.xlu0 %569
        %vm571 = vcmp.lt.s32.totalorder %v557, 112
        %v572 = vsel %vm571, %v564, %v568
        %v573 = vsel %vm571, %v566, %v570
        %v574 = vsel %vm571, %v568, %v564
        %v575 = vsel %vm571, %v570, %v566
        %577 = vset.pattern.permute.xlu0 0
        %578 = vperm.xlu0 %577, %v546
        %v579 = vpop.permute.xlu0 %578
        %582 = vset.pattern.permute.xlu0 0
        %583 = vperm.xlu0 %582, %v547
        %v584 = vpop.permute.xlu0 %583
        %v586 = vmul.f32 %v561, %v579
        %v587 = vmul.f32 %v559, %v579
        %v588 = vmul.f32 %v562, %v584
        %v589 = vmul.f32 %v560, %v584
        %590 = vset.pattern.permute.xlu0 3
        %591 = vperm.xlu0 %590, %v546
        %v592 = vpop.permute.xlu0 %591
        %594 = vset.pattern.permute.xlu0 3
        %595 = vperm.xlu0 %594, %v547
        %v596 = vpop.permute.xlu0 %595
        %v598 = vmul.f32 %v531, %v592
        %v599 = vmul.f32 %v533, %v592
        %v600 = vmul.f32 %v537, %v596
        %v601 = vmul.f32 %v539, %v596
        %v602 = vadd.f32 %v586, %v598
        %v603 = vadd.f32 %v587, %v599
        %v604 = vadd.f32 %v588, %v600
        %v605 = vadd.f32 %v589, %v601
        %606 = vset.pattern.permute.xlu0 6
        %607 = vperm.xlu0 %606, %v546
        %v608 = vpop.permute.xlu0 %607
        %610 = vset.pattern.permute.xlu0 6
        %611 = vperm.xlu0 %610, %v547
        %v612 = vpop.permute.xlu0 %611
        %v614 = vmul.f32 %v572, %v608
        %v615 = vmul.f32 %v574, %v608
        %v616 = vmul.f32 %v573, %v612
        %v617 = vmul.f32 %v575, %v612
        %v618 = vadd.f32 %v602, %v614
        %v619 = vadd.f32 %v603, %v615
        %v620 = vadd.f32 %v604, %v616
        %v621 = vadd.f32 %v605, %v617
        %622 = vset.pattern.permute.xlu0 1
        %623 = vperm.xlu0 %622, %v546
        %v624 = vpop.permute.xlu0 %623
        %626 = vset.pattern.permute.xlu0 1
        %627 = vperm.xlu0 %626, %v547
        %v628 = vpop.permute.xlu0 %627
        %v630 = vmul.f32 %v561, %v624
        %v631 = vmul.f32 %v559, %v624
        %v632 = vmul.f32 %v562, %v628
        %v633 = vmul.f32 %v560, %v628
        %634 = vset.pattern.permute.xlu0 4
        %635 = vperm.xlu0 %634, %v546
        %v636 = vpop.permute.xlu0 %635
        %638 = vset.pattern.permute.xlu0 4
        %639 = vperm.xlu0 %638, %v547
        %v640 = vpop.permute.xlu0 %639
        %v642 = vmul.f32 %v531, %v636
        %v643 = vmul.f32 %v533, %v636
        %v644 = vmul.f32 %v537, %v640
        %v645 = vmul.f32 %v539, %v640
        %v646 = vadd.f32 %v630, %v642
        %v647 = vadd.f32 %v631, %v643
        %v648 = vadd.f32 %v632, %v644
        %v649 = vadd.f32 %v633, %v645
        %650 = vset.pattern.permute.xlu0 7
        %651 = vperm.xlu0 %650, %v546
        %v652 = vpop.permute.xlu0 %651
        %654 = vset.pattern.permute.xlu0 7
        %655 = vperm.xlu0 %654, %v547
        %v656 = vpop.permute.xlu0 %655
        %v658 = vmul.f32 %v572, %v652
        %v659 = vmul.f32 %v574, %v652
        %v660 = vmul.f32 %v573, %v656
        %v661 = vmul.f32 %v575, %v656
        %v662 = vadd.f32 %v646, %v658
        %v663 = vadd.f32 %v647, %v659
        %v664 = vadd.f32 %v648, %v660
        %v665 = vadd.f32 %v649, %v661
        %666 = vset.pattern.permute.xlu0 2
        %667 = vperm.xlu0 %666, %v546
        %v668 = vpop.permute.xlu0 %667
        %670 = vset.pattern.permute.xlu0 2
        %671 = vperm.xlu0 %670, %v547
        %v672 = vpop.permute.xlu0 %671
        %v674 = vmul.f32 %v561, %v668
        %v675 = vmul.f32 %v559, %v668
        %v676 = vmul.f32 %v562, %v672
        %v677 = vmul.f32 %v560, %v672
        %678 = vset.pattern.permute.xlu0 5
        %679 = vperm.xlu0 %678, %v546
        %v680 = vpop.permute.xlu0 %679
        %682 = vset.pattern.permute.xlu0 5
        %683 = vperm.xlu0 %682, %v547
        %v684 = vpop.permute.xlu0 %683
        %v686 = vmul.f32 %v531, %v680
        %v687 = vmul.f32 %v533, %v680
        %v688 = vmul.f32 %v537, %v684
        %v689 = vmul.f32 %v539, %v684
        %v690 = vadd.f32 %v674, %v686
        %v691 = vadd.f32 %v675, %v687
        %v692 = vadd.f32 %v676, %v688
        %v693 = vadd.f32 %v677, %v689
        %694 = vset.pattern.permute.xlu0 8
        %695 = vperm.xlu0 %694, %v546
        %v696 = vpop.permute.xlu0 %695
        %698 = vset.pattern.permute.xlu0 8
        %699 = vperm.xlu0 %698, %v547
        %v700 = vpop.permute.xlu0 %699
        %v702 = vmul.f32 %v572, %v696
        %v703 = vmul.f32 %v574, %v696
        %v704 = vmul.f32 %v573, %v700
        %v705 = vmul.f32 %v575, %v700
        %v706 = vadd.f32 %v690, %v702
        %v707 = vadd.f32 %v691, %v703
        %v708 = vadd.f32 %v692, %v704
        %v709 = vadd.f32 %v693, %v705
        %710 = vrot.lane.b32.xlu0 %v618, 1
        %v711 = vpop.permute.xlu0 %710
        %712 = vrot.lane.b32.xlu0 %v620, 1
        %v713 = vpop.permute.xlu0 %712
        %714 = vrot.lane.b32.xlu0 %v619, 1
        %v715 = vpop.permute.xlu0 %714
        %716 = vrot.lane.b32.xlu0 %v621, 1
        %v717 = vpop.permute.xlu0 %716
        %vm718 = vcmp.lt.s32.totalorder %v557, 1
        %v719 = vsel %vm718, %v711, %v715
        %v720 = vsel %vm718, %v713, %v717
        %v721 = vsel %vm718, %v715, %v711
        %v722 = vsel %vm718, %v717, %v713
        %v724 = vlaneseq
        %v725 = vshrl.u32 %v724, 7
        %v726 = vsub.s32 0, %v725
        %v727 = vrot.slane %v541, %v726
        %v728 = vlaneseq
        %v729 = vshrl.u32 %v728, 7
        %v730 = vsub.s32 1, %v729
        %v731 = vrot.slane %v541, %v730
        %v734 = vmul.f32 %v721, %v727
        %v735 = vmul.f32 %v719, %v731
        %v736 = vmul.f32 %v722, %v727
        %v737 = vmul.f32 %v720, %v731
        %v738 = vadd.f32 %v662, %v734
        %v739 = vadd.f32 %v663, %v735
        %v740 = vadd.f32 %v664, %v736
        %v741 = vadd.f32 %v665, %v737
        %742 = vrot.lane.b32.xlu0 %v706, 127
        %v743 = vpop.permute.xlu0 %742
        %744 = vrot.lane.b32.xlu0 %v708, 127
        %v745 = vpop.permute.xlu0 %744
        %746 = vrot.lane.b32.xlu0 %v707, 127
        %v747 = vpop.permute.xlu0 %746
        %748 = vrot.lane.b32.xlu0 %v709, 127
        %v749 = vpop.permute.xlu0 %748
        %vm750 = vcmp.lt.s32.totalorder %v557, 127
        %v751 = vsel %vm750, %v743, %v747
        %v752 = vsel %vm750, %v745, %v749
        %v753 = vsel %vm750, %v747, %v743
        %v754 = vsel %vm750, %v749, %v745
        %v756 = vlaneseq
        %v757 = vshrl.u32 %v756, 7
        %v758 = vsub.s32 0, %v757
        %v759 = vrot.slane %v543, %v758
        %v760 = vlaneseq
        %v761 = vshrl.u32 %v760, 7
        %v762 = vsub.s32 1, %v761
        %v763 = vrot.slane %v543, %v762
        %v766 = vmul.f32 %v751, %v759
        %v767 = vmul.f32 %v753, %v763
        %v768 = vmul.f32 %v752, %v759
        %v769 = vmul.f32 %v754, %v763
        %v770 = vadd.f32 %v738, %v766
        %v771 = vadd.f32 %v739, %v767
        %v772 = vadd.f32 %v740, %v768
        %v773 = vadd.f32 %v741, %v769
        %v775 = vlaneseq
        %v776 = vshrl.u32 %v775, 7
        %v777 = vsub.s32 0, %v776
        %v778 = vrot.slane %v545, %v777
        %v779 = vlaneseq
        %v780 = vshrl.u32 %v779, 7
        %v781 = vsub.s32 1, %v780
        %v782 = vrot.slane %v545, %v781
        %v785 = vmul.f32 %v770, %v778
        %v786 = vmul.f32 %v771, %v782
        %v787 = vmul.f32 %v772, %v778
        %v788 = vmul.f32 %v773, %v782
        %v789 = vld [vmem:[#allocation3] sm:$0xff]
        %v790 = vld [vmem:[#allocation3 + $0x8] sm:$0xff]
        %v791 = vmul.f32 %v785, %v785
        %v792 = vmul.f32 %v786, %v786
        %v793 = vmul.f32 %v787, %v787
        %v794 = vmul.f32 %v788, %v788
        %v795 = vadd.f32 %v791, %v792
        %796 = vadd.xlane.f32.xlu0 %v795
        %v797 = vpop.xlane.xlu0 %796
        %v798 = vadd.f32 %v793, %v794
        %799 = vadd.xlane.f32.xlu0 %v798
        %v800 = vpop.xlane.xlu0 %799
        %v801 = vadd.f32 %v789, %v797
        %v802 = vadd.f32 %v790, %v800
        %vm803 = vcmask 7168
        %804 = vst.msk [vmem:[#allocation3] sm:$0xff] %vm803, %v801
        %805 = vst.msk [vmem:[#allocation3 + $0x8] sm:$0xff] %vm803, %v802
        %v806 = vld [vmem:[#allocation2] sm:$0xff]
        %807 = vmatprep.subr.mxu0 %v786
        %808 = vmatpush1.xpose.msra.mxu0 %v785
        %809 = vmatprep.subr.mxu0 0.0
        %810 = vmatpush1.xpose.msra.mxu0 0.0
        %811 = vmatprep.subr.mxu0 0.0
        %812 = vmatpush1.xpose.msra.mxu0 0.0
        %813 = vmatprep.subr.mxu0 0.0
        %814 = vmatpush1.xpose.msra.mxu0 0.0
        %815 = vmatprep.subr.mxu0 0.0
        %816 = vmatpush1.xpose.msra.mxu0 0.0
        %817 = vmatprep.subr.mxu0 0.0
        %818 = vmatpush1.xpose.msra.mxu0 0.0
        %819 = vmatprep.subr.mxu0 0.0
        %820 = vmatpush1.xpose.msra.mxu0 0.0
        %821 = vmatprep.subr.mxu0 0.0
        %822 = vmatpush1.xpose.msra.mxu0 0.0
        %823 = vmatprep.subr.mxu0 0.0
        %824 = vmatpush1.xpose.msra.mxu0 0.0
        %825 = vmatprep.subr.mxu0 0.0
        %826 = vmatpush1.xpose.msra.mxu0 0.0
        %827 = vmatprep.subr.mxu0 0.0
        %828 = vmatpush1.xpose.msra.mxu0 0.0
        %829 = vmatprep.subr.mxu0 0.0
        %830 = vmatpush1.xpose.msra.mxu0 0.0
        %831 = vmatprep.subr.mxu0 0.0
        %832 = vmatpush1.xpose.msra.mxu0 0.0
        %833 = vmatprep.subr.mxu0 0.0
        %834 = vmatpush1.xpose.msra.mxu0 0.0
        %835 = vmatprep.subr.mxu0 0.0
        %836 = vmatpush1.xpose.msra.mxu0 0.0
        %837 = vmatprep.subr.mxu0 0.0
        %838 = vmatpush1.xpose.msra.mxu0 0.0
        %839 = vmatprep.subr.mxu0 0.0
        %840 = vmatpush1.xpose.msra.mxu0 0.0
        %841 = vmatprep.subr.mxu0 0.0
        %842 = vmatpush1.xpose.msra.mxu0 0.0
        %843 = vmatprep.subr.mxu0 0.0
        %844 = vmatpush1.xpose.msra.mxu0 0.0
        %845 = vmatprep.subr.mxu0 0.0
        %846 = vmatpush1.xpose.msra.mxu0 0.0
        %847 = vmatprep.subr.mxu0 0.0
        %848 = vmatpush1.xpose.msra.mxu0 0.0
        %849 = vmatprep.subr.mxu0 0.0
        %850 = vmatpush1.xpose.msra.mxu0 0.0
        %851 = vmatprep.subr.mxu0 0.0
        %852 = vmatpush1.xpose.msra.mxu0 0.0
        %853 = vmatprep.subr.mxu0 0.0
        %854 = vmatpush1.xpose.msra.mxu0 0.0
        %855 = vmatprep.subr.mxu0 0.0
        %856 = vmatpush1.xpose.msra.mxu0 0.0
        %857 = vmatprep.subr.mxu0 0.0
        %858 = vmatpush1.xpose.msra.mxu0 0.0
        %859 = vmatprep.subr.mxu0 0.0
        %860 = vmatpush1.xpose.msra.mxu0 0.0
        %861 = vmatprep.subr.mxu0 0.0
        %862 = vmatpush1.xpose.msra.mxu0 0.0
        %863 = vmatprep.subr.mxu0 0.0
        %864 = vmatpush1.xpose.msra.mxu0 0.0
        %865 = vmatprep.subr.mxu0 0.0
        %866 = vmatpush1.xpose.msra.mxu0 0.0
        %867 = vmatprep.subr.mxu0 0.0
        %868 = vmatpush1.xpose.msra.mxu0 0.0
        %869 = vmatprep.subr.mxu0 0.0
        %870 = vmatpush1.xpose.msra.mxu0 0.0
        %871 = vmatprep.mubr.f32.mxu0 %v788
        %872 = vmatmul.mubr.f32.gmra.mrb[0].mxu0 %v787
        %v873 = vpop.f32.mrb[0].mxu0
        %v874 = vadd.f32 0.0, %v873
        %v875 = vpop.f32.mrb[0].mxu0
        %876 = vdwg.mxu0
        %v877 = vadd.f32 %v806, %v874
        %878 = vst.msk [vmem:[#allocation2] sm:$0xff] %vm457, %v877
        %p879 = scmp.eq.s32.totalorder %s33, 1
        // Predicated region
        $region77: #{tpu_custom_call.1} parent=55 // pred_check
          %p880 = pneg %p879
        $region78: #{tpu_custom_call.1} parent=55 // pred_check_branch
          %882 = sbr.rel (%p880) target = $region80
        $region79: #{tpu_custom_call.1} parent=55 // pred_region
          %v883 = vld [vmem:[#allocation3] sm:$0xff]
          %v884 = vld [vmem:[#allocation3 + $0x8] sm:$0xff]
          %v885 = vrsqrt.pop %v883
          %v886 = vmul.f32 %v883, %v885
          %vm887 = vcmp.eq.f32.partialorder %v883, inf
          %v888 = vsel %vm887, %v883, %v886
          %vm889 = vcmp.eq.f32.partialorder %v883, 0.0
          %v890 = vand.u32 %v883, 2147483648
          %v891 = vsel %vm889, %v890, %v888
          %v892 = vrsqrt.pop %v884
          %v893 = vmul.f32 %v884, %v892
          %vm894 = vcmp.eq.f32.partialorder %v884, inf
          %v895 = vsel %vm894, %v884, %v893
          %vm896 = vcmp.eq.f32.partialorder %v884, 0.0
          %v897 = vand.u32 %v884, 2147483648
          %v898 = vsel %vm896, %v897, %v895
          %v899 = vmax.f32 %v891, 1e-12
          %v900 = vmax.f32 %v898, 1e-12
          %v901 = vrcp.pop %v899
          %v902 = vmul.f32 1.0, %v901
          %v903 = vrcp.pop %v900
          %v904 = vmul.f32 1.0, %v903
          %v905 = vld [vmem:[#allocation2] sm:$0xff]
          %v906 = vld [vmem:[%s5] sm:$0xff]
          %v907 = vmul.f32 %v904, %v906
          %909 = vset.pattern.permute.xlu0 0
          %910 = vperm.xlu0 %909, %v907
          %v911 = vpop.permute.xlu0 %910
          %v913 = vmul.f32 %v905, %v911
          %v914 = vld [vmem:[%s7] sm:$0xff]
          %916 = vset.pattern.permute.xlu0 0
          %917 = vperm.xlu0 %916, %v902
          %v918 = vpop.permute.xlu0 %917
          %v920 = vmul.f32 %v914, %v918
          %v921 = vld [vmem:[#allocation10] sm:$0xff]
          %v923 = vsel %vm457, %v913, 0
          %925 = vmatprep.subr.mxu0 0.0
          %926 = vmatpush1.msra.mxu0 %v920
          %927 = vmatprep.subr.mxu0 0.0
          %928 = vmatpush1.msra.mxu0 0.0
          %929 = vmatprep.subr.mxu0 0.0
          %930 = vmatpush1.msra.mxu0 0.0
          %931 = vmatprep.subr.mxu0 0.0
          %932 = vmatpush1.msra.mxu0 0.0
          %933 = vmatprep.subr.mxu0 0.0
          %934 = vmatpush1.msra.mxu0 0.0
          %935 = vmatprep.subr.mxu0 0.0
          %936 = vmatpush1.msra.mxu0 0.0
          %937 = vmatprep.subr.mxu0 0.0
          %938 = vmatpush1.msra.mxu0 0.0
          %939 = vmatprep.subr.mxu0 0.0
          %940 = vmatpush1.msra.mxu0 0.0
          %941 = vmatprep.subr.mxu0 0.0
          %942 = vmatpush1.msra.mxu0 0.0
          %943 = vmatprep.subr.mxu0 0.0
          %944 = vmatpush1.msra.mxu0 0.0
          %945 = vmatprep.subr.mxu0 0.0
          %946 = vmatpush1.msra.mxu0 0.0
          %947 = vmatprep.subr.mxu0 0.0
          %948 = vmatpush1.msra.mxu0 0.0
          %949 = vmatprep.subr.mxu0 0.0
          %950 = vmatpush1.msra.mxu0 0.0
          %951 = vmatprep.subr.mxu0 0.0
          %952 = vmatpush1.msra.mxu0 0.0
          %953 = vmatprep.subr.mxu0 0.0
          %954 = vmatpush1.msra.mxu0 0.0
          %955 = vmatprep.subr.mxu0 0.0
          %956 = vmatpush1.msra.mxu0 0.0
          %957 = vmatprep.subr.mxu0 0.0
          %958 = vmatpush1.msra.mxu0 0.0
          %959 = vmatprep.subr.mxu0 0.0
          %960 = vmatpush1.msra.mxu0 0.0
          %961 = vmatprep.subr.mxu0 0.0
          %962 = vmatpush1.msra.mxu0 0.0
          %963 = vmatprep.subr.mxu0 0.0
          %964 = vmatpush1.msra.mxu0 0.0
          %965 = vmatprep.subr.mxu0 0.0
          %966 = vmatpush1.msra.mxu0 0.0
          %967 = vmatprep.subr.mxu0 0.0
          %968 = vmatpush1.msra.mxu0 0.0
          %969 = vmatprep.subr.mxu0 0.0
          %970 = vmatpush1.msra.mxu0 0.0
          %971 = vmatprep.subr.mxu0 0.0
          %972 = vmatpush1.msra.mxu0 0.0
          %973 = vmatprep.subr.mxu0 0.0
          %974 = vmatpush1.msra.mxu0 0.0
          %975 = vmatprep.subr.mxu0 0.0
          %976 = vmatpush1.msra.mxu0 0.0
          %977 = vmatprep.subr.mxu0 0.0
          %978 = vmatpush1.msra.mxu0 0.0
          %979 = vmatprep.subr.mxu0 0.0
          %980 = vmatpush1.msra.mxu0 0.0
          %981 = vmatprep.subr.mxu0 0.0
          %982 = vmatpush1.msra.mxu0 0.0
          %983 = vmatprep.subr.mxu0 0.0
          %984 = vmatpush1.msra.mxu0 0.0
          %985 = vmatprep.subr.mxu0 0.0
          %986 = vmatpush1.msra.mxu0 0.0
          %987 = vmatprep.subr.mxu0 0.0
          %988 = vmatpush1.msra.mxu0 0.0
          %989 = vmatprep.mubr.f32.mxu0 0.0
          %990 = vmatmul.mubr.f32.gmra.mrb[0].mxu0 %v923
          %v991 = vpop.f32.mrb[0].mxu0
          %v992 = vadd.f32 %v921, %v991
          %v993 = vpop.f32.mrb[0].mxu0
          %994 = vdwg.mxu0
          %v995 = vsel %vm457, %v992, -inf
          %996 = vmax.xlane.f32.xlu0 %v995
          %v997 = vpop.xlane.xlu0 %996
          %v998 = vsub.f32 %v992, %v997
          %v999 = vmul.f32 %v998, 1.442695
          %v1000 = vpow.pop %v999
          %v1001 = vsel %vm457, %v1000, 0.0
          %1002 = vadd.xlane.f32.xlu0 %v1001
          %v1003 = vpop.xlane.xlu0 %1002
          %v1004 = vrcp.pop %v1003
          %v1005 = vmul.f32 %v1000, %v1004
          %v1006 = vld [vmem:[%s4] sm:$0xff]
          %v1008 = vsel %vm457, %v1006, 0
          %1010 = vmatprep.subr.mxu0 0.0
          %1011 = vmatpush1.msra.mxu0 %v1005
          %1012 = vmatprep.subr.mxu0 0.0
          %1013 = vmatpush1.msra.mxu0 0.0
          %1014 = vmatprep.subr.mxu0 0.0
          %1015 = vmatpush1.msra.mxu0 0.0
          %1016 = vmatprep.subr.mxu0 0.0
          %1017 = vmatpush1.msra.mxu0 0.0
          %1018 = vmatprep.subr.mxu0 0.0
          %1019 = vmatpush1.msra.mxu0 0.0
          %1020 = vmatprep.subr.mxu0 0.0
          %1021 = vmatpush1.msra.mxu0 0.0
          %1022 = vmatprep.subr.mxu0 0.0
          %1023 = vmatpush1.msra.mxu0 0.0
          %1024 = vmatprep.subr.mxu0 0.0
          %1025 = vmatpush1.msra.mxu0 0.0
          %1026 = vmatprep.subr.mxu0 0.0
          %1027 = vmatpush1.msra.mxu0 0.0
          %1028 = vmatprep.subr.mxu0 0.0
          %1029 = vmatpush1.msra.mxu0 0.0
          %1030 = vmatprep.subr.mxu0 0.0
          %1031 = vmatpush1.msra.mxu0 0.0
          %1032 = vmatprep.subr.mxu0 0.0
          %1033 = vmatpush1.msra.mxu0 0.0
          %1034 = vmatprep.subr.mxu0 0.0
          %1035 = vmatpush1.msra.mxu0 0.0
          %1036 = vmatprep.subr.mxu0 0.0
          %1037 = vmatpush1.msra.mxu0 0.0
          %1038 = vmatprep.subr.mxu0 0.0
          %1039 = vmatpush1.msra.mxu0 0.0
          %1040 = vmatprep.subr.mxu0 0.0
          %1041 = vmatpush1.msra.mxu0 0.0
          %1042 = vmatprep.subr.mxu0 0.0
          %1043 = vmatpush1.msra.mxu0 0.0
          %1044 = vmatprep.subr.mxu0 0.0
          %1045 = vmatpush1.msra.mxu0 0.0
          %1046 = vmatprep.subr.mxu0 0.0
          %1047 = vmatpush1.msra.mxu0 0.0
          %1048 = vmatprep.subr.mxu0 0.0
          %1049 = vmatpush1.msra.mxu0 0.0
          %1050 = vmatprep.subr.mxu0 0.0
          %1051 = vmatpush1.msra.mxu0 0.0
          %1052 = vmatprep.subr.mxu0 0.0
          %1053 = vmatpush1.msra.mxu0 0.0
          %1054 = vmatprep.subr.mxu0 0.0
          %1055 = vmatpush1.msra.mxu0 0.0
          %1056 = vmatprep.subr.mxu0 0.0
          %1057 = vmatpush1.msra.mxu0 0.0
          %1058 = vmatprep.subr.mxu0 0.0
          %1059 = vmatpush1.msra.mxu0 0.0
          %1060 = vmatprep.subr.mxu0 0.0
          %1061 = vmatpush1.msra.mxu0 0.0
          %1062 = vmatprep.subr.mxu0 0.0
          %1063 = vmatpush1.msra.mxu0 0.0
          %1064 = vmatprep.subr.mxu0 0.0
          %1065 = vmatpush1.msra.mxu0 0.0
          %1066 = vmatprep.subr.mxu0 0.0
          %1067 = vmatpush1.msra.mxu0 0.0
          %1068 = vmatprep.subr.mxu0 0.0
          %1069 = vmatpush1.msra.mxu0 0.0
          %1070 = vmatprep.subr.mxu0 0.0
          %1071 = vmatpush1.msra.mxu0 0.0
          %1072 = vmatprep.subr.mxu0 0.0
          %1073 = vmatpush1.msra.mxu0 0.0
          %1074 = vmatprep.mubr.f32.mxu0 0.0
          %1075 = vmatmul.mubr.f32.gmra.mrb[0].mxu0 %v1008
          %v1076 = vpop.f32.mrb[0].mxu0
          %v1077 = vadd.f32 0.0, %v1076
          %v1078 = vpop.f32.mrb[0].mxu0
          %1079 = vdwg.mxu0
          %1080 = vst.msk [vmem:[%s426] sm:$0xff] %vm457, %v1077
        $region80: #{tpu_custom_call.1} parent=55 // pred_fallthru
          _
        %s1081 = sand.u32 %s251, 1
        %s1082 = scalar_lea.sflag [#allocation6], %s1081
        %s1083 = sand.u32 %s251, 1
        %s1084 = smul.addr %s1083, 8
        %s1085 = scalar_lea.vmem [#allocation12], %s1084
        // Predicated region
        $region81: #{tpu_custom_call.1} parent=55 // pred_check
          %p1086 = pneg %p261
        $region82: #{tpu_custom_call.1} parent=55 // pred_check_branch
          %1088 = sbr.rel (%p1086) target = $region84
        $region83: #{tpu_custom_call.1} parent=55 // pred_region
          %s1090 = ssub.s32 128, 128
          %1091 = vsyncadd %s1082, %s1090
          %s1092 = smul.addr %s32, 128
          %s1093 = scalar_lea.hbm %s9, %s1092
          %s1095 = sshll.u32 %s1085, 4
          %s1096 = int_to_ptr.vmem [resolvable:$true] %s1095
          %1098 = dma.vmem_to_hbm [thread:$0]  %s1096, 128, %s1093, %s1082
        $region84: #{tpu_custom_call.1} parent=55 // pred_fallthru
          _
      $region56: #{tpu_custom_call.1} parent=5 // pred_fallthru
        _
      %p1099 = scmp.le.s32.totalorder 2, %s23
      // Predicated region
      $region85: #{tpu_custom_call.1} parent=5 // pred_check
        %p1100 = pneg %p1099
      $region86: #{tpu_custom_call.1} parent=5 // pred_check_branch
        %1102 = sbr.rel (%p1100) target = $region88
      $region87: #{tpu_custom_call.1} parent=5 // pred_region
        %s1103 = ssub.s32 %s23, 2
        // Predicated region
        $region89: #{tpu_custom_call.1} parent=87 // pred_check
          %p1104 = pneg %p267
        $region90: #{tpu_custom_call.1} parent=87 // pred_check_branch
          %1106 = sbr.rel (%p1104) target = $region92
        $region91: #{tpu_custom_call.1} parent=87 // pred_region
          %s1107 = sand.u32 %s252, 1
          %s1108 = scalar_lea.sflag [#allocation6], %s1107
          %s1109 = sand.u32 %s252, 1
          %s1110 = smul.addr %s1109, 8
          %s1111 = scalar_lea.vmem [#allocation12], %s1110
          %1112 = dma.done %s1108, 128
        $region92: #{tpu_custom_call.1} parent=87 // pred_fallthru
          _
      $region88: #{tpu_custom_call.1} parent=5 // pred_fallthru
        _
    $region6: #{tpu_custom_call.1} parent=1 // loop_footer
      %s27 = sadd.s32 1, %s23
    $region7: #{tpu_custom_call.1} parent=1 // loop_footer_branch
      %22 = sbr.rel target = $region3
    $region8: #{tpu_custom_call.1} parent=1 // loop_exit
      _
    %1113 = vsyncpa [#allocation5], 1
    %s1114 = scalar_lea.sflag [#allocation5], 1
    %1115 = vsyncpa %s1114, 1
    %1116 = vsyncpa [#allocation8], 1
    %1117 = vsyncpa [#allocation11], 1
    %1118 = vsyncpa [#allocation6], 1
    %s1119 = scalar_lea.sflag [#allocation6], 1
    %1120 = vsyncpa %s1119, 1

</llo_original>
